<compile_context>
chip_gen: v7x
topology: tpu7x:2x2x1
jax: 0.10.0
libtpu: 0.0.40
codegen_flags: <defaults>
</compile_context>

<pallas_src>
import functools

import jax
import jax.numpy as jnp
from jax.experimental import pallas as pl
from jax.experimental.pallas import tpu as pltpu

EPS = 1e-5  # nn.BatchNorm2d default eps


# ------------------------------------------------------------------
# Wrapper-side layout helpers (plain JAX glue)
# ------------------------------------------------------------------
def phase_split(x_nhwc, k, stride, pad, pad_value=None):
    """(N,H,W,C) -> (N, stride*stride, Hq, Wq, C) with
    phases[n, py*stride+px, i, j, c] = x_padded[n, i*stride+py, j*stride+px, c].

    Tap (dy, dx) of the conv then reads phase (dy%stride, dx%stride) at the
    unit-stride window [dy//stride : dy//stride+Ho, dx//stride : dx//stride+Wo].

    pad_value: optional per-channel (C,) value used instead of zeros (used to fuse
    the previous layer's BN+ReLU into the conv prologue while keeping zero-padding
    semantics)."""
    N, H, W, C = x_nhwc.shape
    Ho = (H + 2 * pad - k) // stride + 1
    Wo = (W + 2 * pad - k) // stride + 1
    Hq = Ho + (k - 1) // stride
    Wq = Wo + (k - 1) // stride
    Hp, Wp = Hq * stride, Wq * stride
    if pad_value is None:
        xp = jnp.pad(x_nhwc, ((0, 0), (pad, Hp - H - pad), (pad, Wp - W - pad), (0, 0)))
    else:
        xp = jnp.broadcast_to(pad_value.reshape(1, 1, 1, C).astype(x_nhwc.dtype),
                              (N, Hp, Wp, C))
        xp = jax.lax.dynamic_update_slice(xp, x_nhwc, (0, pad, pad, 0))
    xph = xp.reshape(N, Hq, stride, Wq, stride, C).transpose(0, 2, 4, 1, 3, 5)
    return xph.reshape(N, stride * stride, Hq, Wq, C), (N, Ho, Wo)


def bn_affine(s, q, count, gamma, beta):
    """Per-channel BN scale/shift from fused sum / sum-of-squares (training-mode BN)."""
    mean = s / count
    var = jnp.maximum(q / count - mean * mean, 0.0)   # clamp sum-of-squares trick
    scale = gamma * jax.lax.rsqrt(var + EPS)
    shift = beta - mean * scale
    return scale, shift


def relu_zero_pad_value(scale, shift):
    """Per-channel p with p*scale + shift <= -margin < 0, so ReLU(p*scale+shift) == 0
    even after bf16 rounding of p.  Lets zero-padding semantics survive when the
    BN affine + ReLU is applied inside the next conv's prologue."""
    safe = jnp.where(jnp.abs(scale) < 1e-12, 1e-12, scale)
    margin = 0.01 * (jnp.abs(shift) + 1.0)
    return (-shift - margin) / safe


def _fold_weight(w_oihw):
    """(Cout, Cin, k, k) -> (k*k*Cin, Cout) bf16, tap-major (dy, dx, cin) to match
    the kernel's in-VMEM im2col lane order."""
    k = w_oihw.shape[-1]
    w = jnp.transpose(w_oihw, (2, 3, 1, 0))            # (k, k, Cin, Cout)
    return w.reshape(k * k * w.shape[2], w.shape[3]).astype(jnp.bfloat16)


# ------------------------------------------------------------------
# Pallas kernels
# ------------------------------------------------------------------
def _conv_bn_stats_kernel(*refs, k, stride, Ho, Wo, Cin, fuse_prologue):
    """Direct k*k conv as a single MXU dot (in-VMEM im2col, f32 accumulation) with
    BN partial statistics (sum, sum-of-squares) emitted per grid step.  Optionally
    applies the previous layer's BN affine + ReLU to the patch (prologue fusion)."""
    if fuse_prologue:
        xph_ref, w_ref, psc_ref, psh_ref, y_ref, s_ref, q_ref, patch_ref = refs
    else:
        xph_ref, w_ref, y_ref, s_ref, q_ref, patch_ref = refs

    # in-VMEM im2col: scatter the k*k shifted windows along the lane axis of the
    # scratch so the conv becomes ONE dot with contraction depth k*k*Cin.
    t = 0
    for dy in range(k):
        for dx in range(k):
            ph = (dy % stride) * stride + (dx % stride)
            xt = xph_ref[0, ph, pl.ds(dy // stride, Ho), pl.ds(dx // stride, Wo), :]
            patch_ref[:, t * Cin:(t + 1) * Cin] = xt.reshape(Ho * Wo, Cin)
            t += 1

    patch = patch_ref[...]                                     # (Ho*Wo, k*k*Cin) bf16
    if fuse_prologue:
        # y = relu(x*scale + shift) of the previous layer, applied per patch lane
        # (scale/shift are tiled k*k times in the wrapper).
        patch = jnp.maximum(patch.astype(jnp.float32) * psc_ref[...] + psh_ref[...],
                            0.0).astype(jnp.bfloat16)

    acc = jnp.dot(patch, w_ref[...], preferred_element_type=jnp.float32)  # (Ho*Wo, Cout)

    y_ref[0] = acc.astype(y_ref.dtype)
    s_ref[0] = jnp.sum(acc, axis=0, keepdims=True)
    q_ref[0] = jnp.sum(acc * acc, axis=0, keepdims=True)


def pallas_conv_bn_stats(xph, w2d, *, k, stride, Ho, Wo, prologue=None):
    """Conv (bf16 operands, f32 accum) fused with BN statistics.
    prologue = (scale, shift): fuse the previous BN affine + ReLU into the patch."""
    N, ss, Hq, Wq, Cin = xph.shape
    KC, Cout = w2d.shape
    assert KC == k * k * Cin
    fuse = prologue is not None

    kern = functools.partial(_conv_bn_stats_kernel, k=k, stride=stride,
                             Ho=Ho, Wo=Wo, Cin=Cin, fuse_prologue=fuse)

    in_specs = [
        pl.BlockSpec((1, ss, Hq, Wq, Cin), lambda n: (n, 0, 0, 0, 0)),
        pl.BlockSpec((KC, Cout), lambda n: (0, 0)),
    ]
    args = [xph, w2d]
    if fuse:
        psc, psh = prologue
        args += [jnp.tile(psc.reshape(1, Cin).astype(jnp.float32), (1, k * k)),
                 jnp.tile(psh.reshape(1, Cin).astype(jnp.float32), (1, k * k))]
        in_specs += [pl.BlockSpec((1, KC), lambda n: (0, 0)),
                     pl.BlockSpec((1, KC), lambda n: (0, 0))]

    y, s, q = pl.pallas_call(
        kern,
        out_shape=(
            jax.ShapeDtypeStruct((N, Ho * Wo, Cout), jnp.bfloat16),   # bf16 intermediate
            jax.ShapeDtypeStruct((N, 1, Cout), jnp.float32),
            jax.ShapeDtypeStruct((N, 1, Cout), jnp.float32),
        ),
        grid=(N,),   # N>=2 here -> both TensorCores get work on v7x
        in_specs=in_specs,
        out_specs=(
            pl.BlockSpec((1, Ho * Wo, Cout), lambda n: (n, 0, 0)),
            pl.BlockSpec((1, 1, Cout), lambda n: (n, 0, 0)),
            pl.BlockSpec((1, 1, Cout), lambda n: (n, 0, 0)),
        ),
        scratch_shapes=[pltpu.VMEM((Ho * Wo, KC), jnp.bfloat16)],     # im2col patch
        compiler_params=pltpu.CompilerParams(
            dimension_semantics=("parallel",),
            vmem_limit_bytes=32 * 1024 * 1024),
    )(*args)
    return (y.reshape(N * Ho * Wo, Cout),
            jnp.sum(s, axis=0).reshape(-1),
            jnp.sum(q, axis=0).reshape(-1))


def _bn_act_kernel(*refs, relu, res_mode):
    # res_mode: 0 = no residual, 1 = plain residual add, 2 = residual with own BN affine
    if res_mode == 0:
        x_ref, a_ref, b_ref, o_ref = refs
    elif res_mode == 1:
        x_ref, a_ref, b_ref, r_ref, o_ref = refs
    else:
        x_ref, a_ref, b_ref, r_ref, ra_ref, rb_ref, o_ref = refs
    y = x_ref[...].astype(jnp.float32) * a_ref[...] + b_ref[...]
    if relu:
        y = jnp.maximum(y, 0.0)
    if res_mode == 1:
        y = y + r_ref[...].astype(jnp.float32)
    elif res_mode == 2:
        y = y + (r_ref[...].astype(jnp.float32) * ra_ref[...] + rb_ref[...])
    o_ref[...] = y.astype(o_ref.dtype)


def pallas_bn_act(x2d, scale, shift, *, relu, residual=None, res_affine=None,
                  out_dtype=jnp.float32):
    """y = relu?(x*scale + shift) [+ residual | + residual*res_scale + res_shift],
    evaluated on a lane-dense (rows, 128) view when the channel count divides 128."""
    M, C = x2d.shape
    lane_dense = (C <= 128) and (128 % C == 0) and ((M * C) % 128 == 0)
    if lane_dense:
        lane = 128
        rows = (M * C) // lane
        rep = lane // C
        to2d = lambda t: t.reshape(rows, lane)
        vec = lambda v: jnp.tile(v.reshape(1, C).astype(jnp.float32), (1, rep))
    else:
        lane, rows = C, M
        to2d = lambda t: t
        vec = lambda v: v.reshape(1, C).astype(jnp.float32)

    args = [to2d(x2d), vec(scale), vec(shift)]
    res_mode = 0
    if residual is not None:
        args.append(to2d(residual))
        if res_affine is not None:
            args += [vec(res_affine[0]), vec(res_affine[1])]
            res_mode = 2
        else:
            res_mode = 1

    # Mem-bound kernel: fixed large row tiles + cdiv grid (ragged tail masked by
    # Pallas); prefer >=2 steps so megacore gets both cores busy.
    if rows > 2048:
        tm = 1024
    elif rows >= 16 and rows % 16 == 0:
        tm = rows // 2
    else:
        tm = rows
    grid = pl.cdiv(rows, tm)

    row_spec = pl.BlockSpec((tm, lane), lambda i: (i, 0))
    vec_spec = pl.BlockSpec((1, lane), lambda i: (0, 0))
    in_specs = [row_spec, vec_spec, vec_spec]
    if res_mode:
        in_specs.append(row_spec)
    if res_mode == 2:
        in_specs += [vec_spec, vec_spec]

    out = pl.pallas_call(
        functools.partial(_bn_act_kernel, relu=relu, res_mode=res_mode),
        out_shape=jax.ShapeDtypeStruct((rows, lane), out_dtype),
        grid=(grid,),
        in_specs=in_specs,
        out_specs=row_spec,
        compiler_params=pltpu.CompilerParams(dimension_semantics=("parallel",)),
    )(*args)
    return out.reshape(M, C)


# ------------------------------------------------------------------
# Module
# ------------------------------------------------------------------
def _conv_params(key, cin, cout, kernel):
    kw, kb = jax.random.split(key)
    w = 0.1 * jax.random.normal(kw, (cout, cin, kernel, kernel), jnp.float32)
    b = 0.05 * jax.random.normal(kb, (cout,), jnp.float32)
    return w, b


class ResidualUnit:
    def __init__(self, in_channel, out_channel, kernel=3, down_sample=False, key=None):
        if not down_sample:
            # identity-shortcut path: implicit contract of the PyTorch module
            assert in_channel == out_channel, "identity residual needs in == out channels"
        self.down_sample = down_sample
        self.kernel = kernel
        ks = jax.random.split(key, 3)
        # conv bias is kept for the reference only: with training-mode BN right after
        # each conv it cancels exactly, so the Pallas path drops it (dead work).
        self.w1, self.b1 = _conv_params(ks[0], in_channel, out_channel, kernel)
        self.g1 = jnp.ones((out_channel,), jnp.float32)
        self.bt1 = jnp.zeros((out_channel,), jnp.float32)
        self.w2, self.b2 = _conv_params(ks[1], out_channel, out_channel, kernel)
        self.g2 = jnp.ones((out_channel,), jnp.float32)
        self.bt2 = jnp.zeros((out_channel,), jnp.float32)
        self.w1_2d = _fold_weight(self.w1)
        self.w2_2d = _fold_weight(self.w2)
        if down_sample:
            self.wx, self.bx = _conv_params(ks[2], in_channel, out_channel, kernel)
            self.gx = jnp.ones((out_channel,), jnp.float32)
            self.btx = jnp.zeros((out_channel,), jnp.float32)
            self.wx_2d = _fold_weight(self.wx)

    def __call__(self, x_nchw):
        k = self.kernel
        pad = k // 2
        x = jnp.transpose(x_nchw, (0, 2, 3, 1)).astype(jnp.float32)    # NHWC
        stride1 = 2 if self.down_sample else 1

        # conv1 (+ fused BN1 statistics)
        xph1, (N, Ho, Wo) = phase_split(x.astype(jnp.bfloat16), k, stride1, pad)
        h1, s1, q1 = pallas_conv_bn_stats(xph1, self.w1_2d, k=k, stride=stride1,
                                          Ho=Ho, Wo=Wo)
        M = N * Ho * Wo
        sc1, sh1 = bn_affine(s1, q1, M, self.g1, self.bt1)

        # conv2 with BN1 + ReLU fused into its prologue: pad h1 with the per-channel
        # value that maps to exactly 0 under ReLU(BN1 affine) -> no extra HBM pass.
        pad1 = relu_zero_pad_value(sc1, sh1)
        xph2, _ = phase_split(h1.reshape(N, Ho, Wo, -1), k, 1, pad, pad_value=pad1)
        h2, s2, q2 = pallas_conv_bn_stats(xph2, self.w2_2d, k=k, stride=1,
                                          Ho=Ho, Wo=Wo, prologue=(sc1, sh1))
        sc2, sh2 = bn_affine(s2, q2, M, self.g2, self.bt2)

        if self.down_sample:
            # shortcut conv reuses the same phase-split view of x (stride 2)
            sx, sxs, sxq = pallas_conv_bn_stats(xph1, self.wx_2d, k=k, stride=2,
                                                Ho=Ho, Wo=Wo)
            scx, shx = bn_affine(sxs, sxq, M, self.gx, self.btx)
            out = pallas_bn_act(h2, sc2, sh2, relu=True,
                                residual=sx, res_affine=(scx, shx))
        else:
            out = pallas_bn_act(h2, sc2, sh2, relu=True,
                                residual=x.reshape(M, -1))

        return jnp.transpose(out.reshape(N, Ho, Wo, -1), (0, 3, 1, 2))  # back to NCHW

    # -------- pure-JAX reference (for correctness check) --------
    def reference(self, x_nchw):
        def conv(xh, w, b, stride):
            pad = self.kernel // 2
            y = jax.lax.conv_general_dilated(
                xh, jnp.transpose(w, (2, 3, 1, 0)), (stride, stride),
                [(pad, pad), (pad, pad)], dimension_numbers=("NHWC", "HWIO", "NHWC"))
            return y + b.reshape(1, 1, 1, -1)

        def bn(y, g, bt):
            mean = jnp.mean(y, axis=(0, 1, 2), keepdims=True)
            var = jnp.mean((y - mean) ** 2, axis=(0, 1, 2), keepdims=True)
            return (y - mean) * jax.lax.rsqrt(var + EPS) * g.reshape(1, 1, 1, -1) \
                   + bt.reshape(1, 1, 1, -1)

        x = jnp.transpose(x_nchw, (0, 2, 3, 1)).astype(jnp.float32)
        stride1 = 2 if self.down_sample else 1
        h = jax.nn.relu(bn(conv(x, self.w1, self.b1, stride1), self.g1, self.bt1))
        f = jax.nn.relu(bn(conv(h, self.w2, self.b2, 1), self.g2, self.bt2))
        if self.down_sample:
            sx = bn(conv(x, self.wx, self.bx, 2), self.gx, self.btx)
            out = f + sx
        else:
            out = f + x
        return jnp.transpose(out, (0, 3, 1, 2))


# ------------------------------------------------------------------
if __name__ == "__main__":
    key = jax.random.PRNGKey(0)
    kx, kp1, kp2 = jax.random.split(key, 3)
    x = jax.random.normal(kx, (2, 4, 16, 16), jnp.float32)   # NCHW, like PyTorch

    # down-sampling unit: 4 -> 8 channels, 16x16 -> 8x8 (exercises the x_conv branch)
    unit_ds = ResidualUnit(4, 8, kernel=3, down_sample=True, key=kp1)
    out_ds = jax.block_until_ready(jax.jit(unit_ds.__call__)(x))
    ref_ds = unit_ds.reference(x)
    assert out_ds.shape == (2, 8, 8, 8), out_ds.shape
    assert jnp.allclose(out_ds, ref_ds, atol=5e-2, rtol=5e-2), \
        float(jnp.max(jnp.abs(out_ds - ref_ds)))

    # identity unit: 4 -> 4 channels, spatial preserved (plain residual add)
    unit_id = ResidualUnit(4, 4, kernel=3, down_sample=False, key=kp2)
    out_id = jax.block_until_ready(jax.jit(unit_id.__call__)(x))
    ref_id = unit_id.reference(x)
    assert out_id.shape == (2, 4, 16, 16), out_id.shape
    assert jnp.allclose(out_id, ref_id, atol=5e-2, rtol=5e-2), \
        float(jnp.max(jnp.abs(out_id - ref_id)))

    print("KERNEL_OK")
</pallas_src>

<mosaic_0001>
module attributes {stable_mosaic.version = 11 : i64} {
  func.func @_conv_bn_stats_kernel(%arg0: i32, %arg1: memref<1x4x9x9x4xbf16, #tpu.memory_space<vmem>>, %arg2: memref<36x8xbf16, #tpu.memory_space<vmem>>, %arg3: memref<1x64x8xbf16, #tpu.memory_space<vmem>>, %arg4: memref<1x1x8xf32, #tpu.memory_space<vmem>>, %arg5: memref<1x1x8xf32, #tpu.memory_space<vmem>>, %arg6: memref<64x36xbf16, #tpu.memory_space<vmem>>) attributes {dimension_semantics = [#tpu.dimension_semantics<parallel>], iteration_bounds = array<i64: 2>, scalar_prefetch = 0 : i64, scratch_operands = 1 : i64, tpu.core_type = #tpu.core_type<tc>, window_params = [{transform_indices = @transform_0, window_bounds = array<i64: 1, 4, 9, 9, 4>}, {pipeline_mode = #tpu.pipeline_mode<synchronous>, transform_indices = @transform_1, window_bounds = array<i64: 36, 8>}, {transform_indices = @transform_2, window_bounds = array<i64: 1, 64, 8>}, {transform_indices = @transform_3, window_bounds = array<i64: 1, 1, 8>}, {transform_indices = @transform_4, window_bounds = array<i64: 1, 1, 8>}]} {
    %c0 = arith.constant 0 : index
    %c0_0 = arith.constant 0 : index
    %c0_1 = arith.constant 0 : index
    %c0_2 = arith.constant 0 : index
    %c0_3 = arith.constant 0 : index
    %0 = vector.load %arg1[%c0, %c0_0, %c0_1, %c0_2, %c0_3] : memref<1x4x9x9x4xbf16, #tpu.memory_space<vmem>>, vector<1x1x8x8x4xbf16>
    %1 = vector.shape_cast %0 : vector<1x1x8x8x4xbf16> to vector<8x8x4xbf16>
    %2 = vector.shape_cast %1 : vector<8x8x4xbf16> to vector<64x4xbf16>
    %c0_4 = arith.constant 0 : index
    %c0_5 = arith.constant 0 : index
    %3 = vector.load %arg6[%c0_4, %c0_5] : memref<64x36xbf16, #tpu.memory_space<vmem>>, vector<64x4xbf16>
    tpu.vector_store %arg6[%c0_4, %c0_5], %2 {strides = array<i32>} : memref<64x36xbf16, #tpu.memory_space<vmem>>, vector<64x4xbf16>,
    %c0_6 = arith.constant 0 : index
    %c1 = arith.constant 1 : index
    %c0_7 = arith.constant 0 : index
    %c0_8 = arith.constant 0 : index
    %c0_9 = arith.constant 0 : index
    %4 = vector.load %arg1[%c0_6, %c1, %c0_7, %c0_8, %c0_9] : memref<1x4x9x9x4xbf16, #tpu.memory_space<vmem>>, vector<1x1x8x8x4xbf16>
    %5 = vector.shape_cast %4 : vector<1x1x8x8x4xbf16> to vector<8x8x4xbf16>
    %6 = vector.shape_cast %5 : vector<8x8x4xbf16> to vector<64x4xbf16>
    %c0_10 = arith.constant 0 : index
    %c4 = arith.constant 4 : index
    %7 = vector.load %arg6[%c0_10, %c4] : memref<64x36xbf16, #tpu.memory_space<vmem>>, vector<64x4xbf16>
    tpu.vector_store %arg6[%c0_10, %c4], %6 {strides = array<i32>} : memref<64x36xbf16, #tpu.memory_space<vmem>>, vector<64x4xbf16>,
    %c0_11 = arith.constant 0 : index
    %c0_12 = arith.constant 0 : index
    %c0_13 = arith.constant 0 : index
    %c1_14 = arith.constant 1 : index
    %c0_15 = arith.constant 0 : index
    %8 = vector.load %arg1[%c0_11, %c0_12, %c0_13, %c1_14, %c0_15] : memref<1x4x9x9x4xbf16, #tpu.memory_space<vmem>>, vector<1x1x8x8x4xbf16>
    %9 = vector.shape_cast %8 : vector<1x1x8x8x4xbf16> to vector<8x8x4xbf16>
    %10 = vector.shape_cast %9 : vector<8x8x4xbf16> to vector<64x4xbf16>
    %c0_16 = arith.constant 0 : index
    %c8 = arith.constant 8 : index
    %11 = vector.load %arg6[%c0_16, %c8] : memref<64x36xbf16, #tpu.memory_space<vmem>>, vector<64x4xbf16>
    tpu.vector_store %arg6[%c0_16, %c8], %10 {strides = array<i32>} : memref<64x36xbf16, #tpu.memory_space<vmem>>, vector<64x4xbf16>,
    %c0_17 = arith.constant 0 : index
    %c2 = arith.constant 2 : index
    %c0_18 = arith.constant 0 : index
    %c0_19 = arith.constant 0 : index
    %c0_20 = arith.constant 0 : index
    %12 = vector.load %arg1[%c0_17, %c2, %c0_18, %c0_19, %c0_20] : memref<1x4x9x9x4xbf16, #tpu.memory_space<vmem>>, vector<1x1x8x8x4xbf16>
    %13 = vector.shape_cast %12 : vector<1x1x8x8x4xbf16> to vector<8x8x4xbf16>
    %14 = vector.shape_cast %13 : vector<8x8x4xbf16> to vector<64x4xbf16>
    %c0_21 = arith.constant 0 : index
    %c12 = arith.constant 12 : index
    %15 = vector.load %arg6[%c0_21, %c12] : memref<64x36xbf16, #tpu.memory_space<vmem>>, vector<64x4xbf16>
    tpu.vector_store %arg6[%c0_21, %c12], %14 {strides = array<i32>} : memref<64x36xbf16, #tpu.memory_space<vmem>>, vector<64x4xbf16>,
    %c0_22 = arith.constant 0 : index
    %c3 = arith.constant 3 : index
    %c0_23 = arith.constant 0 : index
    %c0_24 = arith.constant 0 : index
    %c0_25 = arith.constant 0 : index
    %16 = vector.load %arg1[%c0_22, %c3, %c0_23, %c0_24, %c0_25] : memref<1x4x9x9x4xbf16, #tpu.memory_space<vmem>>, vector<1x1x8x8x4xbf16>
    %17 = vector.shape_cast %16 : vector<1x1x8x8x4xbf16> to vector<8x8x4xbf16>
    %18 = vector.shape_cast %17 : vector<8x8x4xbf16> to vector<64x4xbf16>
    %c0_26 = arith.constant 0 : index
    %c16 = arith.constant 16 : index
    %19 = vector.load %arg6[%c0_26, %c16] : memref<64x36xbf16, #tpu.memory_space<vmem>>, vector<64x4xbf16>
    tpu.vector_store %arg6[%c0_26, %c16], %18 {strides = array<i32>} : memref<64x36xbf16, #tpu.memory_space<vmem>>, vector<64x4xbf16>,
    %c0_27 = arith.constant 0 : index
    %c2_28 = arith.constant 2 : index
    %c0_29 = arith.constant 0 : index
    %c1_30 = arith.constant 1 : index
    %c0_31 = arith.constant 0 : index
    %20 = vector.load %arg1[%c0_27, %c2_28, %c0_29, %c1_30, %c0_31] : memref<1x4x9x9x4xbf16, #tpu.memory_space<vmem>>, vector<1x1x8x8x4xbf16>
    %21 = vector.shape_cast %20 : vector<1x1x8x8x4xbf16> to vector<8x8x4xbf16>
    %22 = vector.shape_cast %21 : vector<8x8x4xbf16> to vector<64x4xbf16>
    %c0_32 = arith.constant 0 : index
    %c20 = arith.constant 20 : index
    %23 = vector.load %arg6[%c0_32, %c20] : memref<64x36xbf16, #tpu.memory_space<vmem>>, vector<64x4xbf16>
    tpu.vector_store %arg6[%c0_32, %c20], %22 {strides = array<i32>} : memref<64x36xbf16, #tpu.memory_space<vmem>>, vector<64x4xbf16>,
    %c0_33 = arith.constant 0 : index
    %c0_34 = arith.constant 0 : index
    %c1_35 = arith.constant 1 : index
    %c0_36 = arith.constant 0 : index
    %c0_37 = arith.constant 0 : index
    %24 = vector.load %arg1[%c0_33, %c0_34, %c1_35, %c0_36, %c0_37] : memref<1x4x9x9x4xbf16, #tpu.memory_space<vmem>>, vector<1x1x8x8x4xbf16>
    %25 = vector.shape_cast %24 : vector<1x1x8x8x4xbf16> to vector<8x8x4xbf16>
    %26 = vector.shape_cast %25 : vector<8x8x4xbf16> to vector<64x4xbf16>
    %c0_38 = arith.constant 0 : index
    %c24 = arith.constant 24 : index
    %27 = vector.load %arg6[%c0_38, %c24] : memref<64x36xbf16, #tpu.memory_space<vmem>>, vector<64x4xbf16>
    tpu.vector_store %arg6[%c0_38, %c24], %26 {strides = array<i32>} : memref<64x36xbf16, #tpu.memory_space<vmem>>, vector<64x4xbf16>,
    %c0_39 = arith.constant 0 : index
    %c1_40 = arith.constant 1 : index
    %c1_41 = arith.constant 1 : index
    %c0_42 = arith.constant 0 : index
    %c0_43 = arith.constant 0 : index
    %28 = vector.load %arg1[%c0_39, %c1_40, %c1_41, %c0_42, %c0_43] : memref<1x4x9x9x4xbf16, #tpu.memory_space<vmem>>, vector<1x1x8x8x4xbf16>
    %29 = vector.shape_cast %28 : vector<1x1x8x8x4xbf16> to vector<8x8x4xbf16>
    %30 = vector.shape_cast %29 : vector<8x8x4xbf16> to vector<64x4xbf16>
    %c0_44 = arith.constant 0 : index
    %c28 = arith.constant 28 : index
    %31 = vector.load %arg6[%c0_44, %c28] : memref<64x36xbf16, #tpu.memory_space<vmem>>, vector<64x4xbf16>
    tpu.vector_store %arg6[%c0_44, %c28], %30 {strides = array<i32>} : memref<64x36xbf16, #tpu.memory_space<vmem>>, vector<64x4xbf16>,
    %c0_45 = arith.constant 0 : index
    %c0_46 = arith.constant 0 : index
    %c1_47 = arith.constant 1 : index
    %c1_48 = arith.constant 1 : index
    %c0_49 = arith.constant 0 : index
    %32 = vector.load %arg1[%c0_45, %c0_46, %c1_47, %c1_48, %c0_49] : memref<1x4x9x9x4xbf16, #tpu.memory_space<vmem>>, vector<1x1x8x8x4xbf16>
    %33 = vector.shape_cast %32 : vector<1x1x8x8x4xbf16> to vector<8x8x4xbf16>
    %34 = vector.shape_cast %33 : vector<8x8x4xbf16> to vector<64x4xbf16>
    %c0_50 = arith.constant 0 : index
    %c32 = arith.constant 32 : index
    %35 = vector.load %arg6[%c0_50, %c32] : memref<64x36xbf16, #tpu.memory_space<vmem>>, vector<64x4xbf16>
    tpu.vector_store %arg6[%c0_50, %c32], %34 {strides = array<i32>} : memref<64x36xbf16, #tpu.memory_space<vmem>>, vector<64x4xbf16>,
    %c0_51 = arith.constant 0 : index
    %c0_52 = arith.constant 0 : index
    %36 = vector.load %arg6[%c0_51, %c0_52] : memref<64x36xbf16, #tpu.memory_space<vmem>>, vector<64x36xbf16>
    %c0_53 = arith.constant 0 : index
    %c0_54 = arith.constant 0 : index
    %37 = vector.load %arg2[%c0_53, %c0_54] : memref<36x8xbf16, #tpu.memory_space<vmem>>, vector<36x8xbf16>
    %cst = arith.constant dense<0.000000e+00> : vector<64x8xf32>
    %38 = tpu.matmul %36, %37, %cst {dimension_numbers = #tpu.dot_dimension_numbers<[1], [0], [0], [1], [0, 0, 1, 1], [], []>} : vector<64x36xbf16>, vector<36x8xbf16>, vector<64x8xf32> -> vector<64x8xf32>
    %39 = arith.truncf %38 : vector<64x8xf32> to vector<64x8xbf16>
    %c0_55 = arith.constant 0 : index
    %c0_56 = arith.constant 0 : index
    %c0_57 = arith.constant 0 : index
    %40 = vector.load %arg3[%c0_55, %c0_56, %c0_57] : memref<1x64x8xbf16, #tpu.memory_space<vmem>>, vector<1x64x8xbf16>
    %41 = vector.shape_cast %40 : vector<1x64x8xbf16> to vector<64x8xbf16>
    %42 = vector.shape_cast %39 : vector<64x8xbf16> to vector<1x64x8xbf16>
    tpu.vector_store %arg3[%c0_55, %c0_56, %c0_57], %42 {strides = array<i32>} : memref<1x64x8xbf16, #tpu.memory_space<vmem>>, vector<1x64x8xbf16>,
    %cst_58 = arith.constant dense<0.000000e+00> : vector<8xf32>
    %43 = vector.multi_reduction <add>, %38, %cst_58 [0] : vector<64x8xf32> to vector<8xf32>
    %44 = vector.shape_cast %43 : vector<8xf32> to vector<1x8xf32>
    %c0_59 = arith.constant 0 : index
    %c0_60 = arith.constant 0 : index
    %c0_61 = arith.constant 0 : index
    %45 = vector.load %arg4[%c0_59, %c0_60, %c0_61] : memref<1x1x8xf32, #tpu.memory_space<vmem>>, vector<1x1x8xf32>
    %46 = vector.shape_cast %45 : vector<1x1x8xf32> to vector<1x8xf32>
    %47 = vector.shape_cast %44 : vector<1x8xf32> to vector<1x1x8xf32>
    tpu.vector_store %arg4[%c0_59, %c0_60, %c0_61], %47 {strides = array<i32>} : memref<1x1x8xf32, #tpu.memory_space<vmem>>, vector<1x1x8xf32>,
    %48 = arith.mulf %38, %38 : vector<64x8xf32>
    %cst_62 = arith.constant dense<0.000000e+00> : vector<8xf32>
    %49 = vector.multi_reduction <add>, %48, %cst_62 [0] : vector<64x8xf32> to vector<8xf32>
    %50 = vector.shape_cast %49 : vector<8xf32> to vector<1x8xf32>
    %c0_63 = arith.constant 0 : index
    %c0_64 = arith.constant 0 : index
    %c0_65 = arith.constant 0 : index
    %51 = vector.load %arg5[%c0_63, %c0_64, %c0_65] : memref<1x1x8xf32, #tpu.memory_space<vmem>>, vector<1x1x8xf32>
    %52 = vector.shape_cast %51 : vector<1x1x8xf32> to vector<1x8xf32>
    %53 = vector.shape_cast %50 : vector<1x8xf32> to vector<1x1x8xf32>
    tpu.vector_store %arg5[%c0_63, %c0_64, %c0_65], %53 {strides = array<i32>} : memref<1x1x8xf32, #tpu.memory_space<vmem>>, vector<1x1x8xf32>,
    return
  }
  func.func @transform_0(%arg0: i32) -> (i32, i32, i32, i32, i32) {
    %c0_i32 = arith.constant 0 : i32
    %c0_i32_0 = arith.constant 0 : i32
    %c0_i32_1 = arith.constant 0 : i32
    %c0_i32_2 = arith.constant 0 : i32
    %c0_i32_3 = arith.constant 0 : i32
    return %arg0, %c0_i32, %c0_i32_0, %c0_i32_1, %c0_i32_2 : i32, i32, i32, i32, i32
  }
  func.func @transform_1(%arg0: i32) -> (i32, i32) {
    %c0_i32 = arith.constant 0 : i32
    %c0_i32_0 = arith.constant 0 : i32
    %c0_i32_1 = arith.constant 0 : i32
    return %c0_i32, %c0_i32_0 : i32, i32
  }
  func.func @transform_2(%arg0: i32) -> (i32, i32, i32) {
    %c0_i32 = arith.constant 0 : i32
    %c0_i32_0 = arith.constant 0 : i32
    %c0_i32_1 = arith.constant 0 : i32
    return %arg0, %c0_i32, %c0_i32_0 : i32, i32, i32
  }
  func.func @transform_3(%arg0: i32) -> (i32, i32, i32) {
    %c0_i32 = arith.constant 0 : i32
    %c0_i32_0 = arith.constant 0 : i32
    %c0_i32_1 = arith.constant 0 : i32
    return %arg0, %c0_i32, %c0_i32_0 : i32, i32, i32
  }
  func.func @transform_4(%arg0: i32) -> (i32, i32, i32) {
    %c0_i32 = arith.constant 0 : i32
    %c0_i32_0 = arith.constant 0 : i32
    %c0_i32_1 = arith.constant 0 : i32
    return %arg0, %c0_i32, %c0_i32_0 : i32, i32, i32
  }
}

module attributes {stable_mosaic.version = 11 : i64} {
  func.func @_conv_bn_stats_kernel(%arg0: i32, %arg1: memref<1x1x10x10x8xbf16, #tpu.memory_space<vmem>>, %arg2: memref<72x8xbf16, #tpu.memory_space<vmem>>, %arg3: memref<1x72xf32, #tpu.memory_space<vmem>>, %arg4: memref<1x72xf32, #tpu.memory_space<vmem>>, %arg5: memref<1x64x8xbf16, #tpu.memory_space<vmem>>, %arg6: memref<1x1x8xf32, #tpu.memory_space<vmem>>, %arg7: memref<1x1x8xf32, #tpu.memory_space<vmem>>, %arg8: memref<64x72xbf16, #tpu.memory_space<vmem>>) attributes {dimension_semantics = [#tpu.dimension_semantics<parallel>], iteration_bounds = array<i64: 2>, scalar_prefetch = 0 : i64, scratch_operands = 1 : i64, tpu.core_type = #tpu.core_type<tc>, window_params = [{transform_indices = @transform_0, window_bounds = array<i64: 1, 1, 10, 10, 8>}, {pipeline_mode = #tpu.pipeline_mode<synchronous>, transform_indices = @transform_1, window_bounds = array<i64: 72, 8>}, {pipeline_mode = #tpu.pipeline_mode<synchronous>, transform_indices = @transform_2, window_bounds = array<i64: 1, 72>}, {pipeline_mode = #tpu.pipeline_mode<synchronous>, transform_indices = @transform_3, window_bounds = array<i64: 1, 72>}, {transform_indices = @transform_4, window_bounds = array<i64: 1, 64, 8>}, {transform_indices = @transform_5, window_bounds = array<i64: 1, 1, 8>}, {transform_indices = @transform_6, window_bounds = array<i64: 1, 1, 8>}]} {
    %c0 = arith.constant 0 : index
    %c0_0 = arith.constant 0 : index
    %c0_1 = arith.constant 0 : index
    %c0_2 = arith.constant 0 : index
    %c0_3 = arith.constant 0 : index
    %0 = vector.load %arg1[%c0, %c0_0, %c0_1, %c0_2, %c0_3] : memref<1x1x10x10x8xbf16, #tpu.memory_space<vmem>>, vector<1x1x8x8x8xbf16>
    %1 = vector.shape_cast %0 : vector<1x1x8x8x8xbf16> to vector<8x8x8xbf16>
    %2 = vector.shape_cast %1 : vector<8x8x8xbf16> to vector<64x8xbf16>
    %c0_4 = arith.constant 0 : index
    %c0_5 = arith.constant 0 : index
    %3 = vector.load %arg8[%c0_4, %c0_5] : memref<64x72xbf16, #tpu.memory_space<vmem>>, vector<64x8xbf16>
    tpu.vector_store %arg8[%c0_4, %c0_5], %2 {strides = array<i32>} : memref<64x72xbf16, #tpu.memory_space<vmem>>, vector<64x8xbf16>,
    %c0_6 = arith.constant 0 : index
    %c0_7 = arith.constant 0 : index
    %c0_8 = arith.constant 0 : index
    %c1 = arith.constant 1 : index
    %c0_9 = arith.constant 0 : index
    %4 = vector.load %arg1[%c0_6, %c0_7, %c0_8, %c1, %c0_9] : memref<1x1x10x10x8xbf16, #tpu.memory_space<vmem>>, vector<1x1x8x8x8xbf16>
    %5 = vector.shape_cast %4 : vector<1x1x8x8x8xbf16> to vector<8x8x8xbf16>
    %6 = vector.shape_cast %5 : vector<8x8x8xbf16> to vector<64x8xbf16>
    %c0_10 = arith.constant 0 : index
    %c8 = arith.constant 8 : index
    %7 = vector.load %arg8[%c0_10, %c8] : memref<64x72xbf16, #tpu.memory_space<vmem>>, vector<64x8xbf16>
    tpu.vector_store %arg8[%c0_10, %c8], %6 {strides = array<i32>} : memref<64x72xbf16, #tpu.memory_space<vmem>>, vector<64x8xbf16>,
    %c0_11 = arith.constant 0 : index
    %c0_12 = arith.constant 0 : index
    %c0_13 = arith.constant 0 : index
    %c2 = arith.constant 2 : index
    %c0_14 = arith.constant 0 : index
    %8 = vector.load %arg1[%c0_11, %c0_12, %c0_13, %c2, %c0_14] : memref<1x1x10x10x8xbf16, #tpu.memory_space<vmem>>, vector<1x1x8x8x8xbf16>
    %9 = vector.shape_cast %8 : vector<1x1x8x8x8xbf16> to vector<8x8x8xbf16>
    %10 = vector.shape_cast %9 : vector<8x8x8xbf16> to vector<64x8xbf16>
    %c0_15 = arith.constant 0 : index
    %c16 = arith.constant 16 : index
    %11 = vector.load %arg8[%c0_15, %c16] : memref<64x72xbf16, #tpu.memory_space<vmem>>, vector<64x8xbf16>
    tpu.vector_store %arg8[%c0_15, %c16], %10 {strides = array<i32>} : memref<64x72xbf16, #tpu.memory_space<vmem>>, vector<64x8xbf16>,
    %c0_16 = arith.constant 0 : index
    %c0_17 = arith.constant 0 : index
    %c1_18 = arith.constant 1 : index
    %c0_19 = arith.constant 0 : index
    %c0_20 = arith.constant 0 : index
    %12 = vector.load %arg1[%c0_16, %c0_17, %c1_18, %c0_19, %c0_20] : memref<1x1x10x10x8xbf16, #tpu.memory_space<vmem>>, vector<1x1x8x8x8xbf16>
    %13 = vector.shape_cast %12 : vector<1x1x8x8x8xbf16> to vector<8x8x8xbf16>
    %14 = vector.shape_cast %13 : vector<8x8x8xbf16> to vector<64x8xbf16>
    %c0_21 = arith.constant 0 : index
    %c24 = arith.constant 24 : index
    %15 = vector.load %arg8[%c0_21, %c24] : memref<64x72xbf16, #tpu.memory_space<vmem>>, vector<64x8xbf16>
    tpu.vector_store %arg8[%c0_21, %c24], %14 {strides = array<i32>} : memref<64x72xbf16, #tpu.memory_space<vmem>>, vector<64x8xbf16>,
    %c0_22 = arith.constant 0 : index
    %c0_23 = arith.constant 0 : index
    %c1_24 = arith.constant 1 : index
    %c1_25 = arith.constant 1 : index
    %c0_26 = arith.constant 0 : index
    %16 = vector.load %arg1[%c0_22, %c0_23, %c1_24, %c1_25, %c0_26] : memref<1x1x10x10x8xbf16, #tpu.memory_space<vmem>>, vector<1x1x8x8x8xbf16>
    %17 = vector.shape_cast %16 : vector<1x1x8x8x8xbf16> to vector<8x8x8xbf16>
    %18 = vector.shape_cast %17 : vector<8x8x8xbf16> to vector<64x8xbf16>
    %c0_27 = arith.constant 0 : index
    %c32 = arith.constant 32 : index
    %19 = vector.load %arg8[%c0_27, %c32] : memref<64x72xbf16, #tpu.memory_space<vmem>>, vector<64x8xbf16>
    tpu.vector_store %arg8[%c0_27, %c32], %18 {strides = array<i32>} : memref<64x72xbf16, #tpu.memory_space<vmem>>, vector<64x8xbf16>,
    %c0_28 = arith.constant 0 : index
    %c0_29 = arith.constant 0 : index
    %c1_30 = arith.constant 1 : index
    %c2_31 = arith.constant 2 : index
    %c0_32 = arith.constant 0 : index
    %20 = vector.load %arg1[%c0_28, %c0_29, %c1_30, %c2_31, %c0_32] : memref<1x1x10x10x8xbf16, #tpu.memory_space<vmem>>, vector<1x1x8x8x8xbf16>
    %21 = vector.shape_cast %20 : vector<1x1x8x8x8xbf16> to vector<8x8x8xbf16>
    %22 = vector.shape_cast %21 : vector<8x8x8xbf16> to vector<64x8xbf16>
    %c0_33 = arith.constant 0 : index
    %c40 = arith.constant 40 : index
    %23 = vector.load %arg8[%c0_33, %c40] : memref<64x72xbf16, #tpu.memory_space<vmem>>, vector<64x8xbf16>
    tpu.vector_store %arg8[%c0_33, %c40], %22 {strides = array<i32>} : memref<64x72xbf16, #tpu.memory_space<vmem>>, vector<64x8xbf16>,
    %c0_34 = arith.constant 0 : index
    %c0_35 = arith.constant 0 : index
    %c2_36 = arith.constant 2 : index
    %c0_37 = arith.constant 0 : index
    %c0_38 = arith.constant 0 : index
    %24 = vector.load %arg1[%c0_34, %c0_35, %c2_36, %c0_37, %c0_38] : memref<1x1x10x10x8xbf16, #tpu.memory_space<vmem>>, vector<1x1x8x8x8xbf16>
    %25 = vector.shape_cast %24 : vector<1x1x8x8x8xbf16> to vector<8x8x8xbf16>
    %26 = vector.shape_cast %25 : vector<8x8x8xbf16> to vector<64x8xbf16>
    %c0_39 = arith.constant 0 : index
    %c48 = arith.constant 48 : index
    %27 = vector.load %arg8[%c0_39, %c48] : memref<64x72xbf16, #tpu.memory_space<vmem>>, vector<64x8xbf16>
    tpu.vector_store %arg8[%c0_39, %c48], %26 {strides = array<i32>} : memref<64x72xbf16, #tpu.memory_space<vmem>>, vector<64x8xbf16>,
    %c0_40 = arith.constant 0 : index
    %c0_41 = arith.constant 0 : index
    %c2_42 = arith.constant 2 : index
    %c1_43 = arith.constant 1 : index
    %c0_44 = arith.constant 0 : index
    %28 = vector.load %arg1[%c0_40, %c0_41, %c2_42, %c1_43, %c0_44] : memref<1x1x10x10x8xbf16, #tpu.memory_space<vmem>>, vector<1x1x8x8x8xbf16>
    %29 = vector.shape_cast %28 : vector<1x1x8x8x8xbf16> to vector<8x8x8xbf16>
    %30 = vector.shape_cast %29 : vector<8x8x8xbf16> to vector<64x8xbf16>
    %c0_45 = arith.constant 0 : index
    %c56 = arith.constant 56 : index
    %31 = vector.load %arg8[%c0_45, %c56] : memref<64x72xbf16, #tpu.memory_space<vmem>>, vector<64x8xbf16>
    tpu.vector_store %arg8[%c0_45, %c56], %30 {strides = array<i32>} : memref<64x72xbf16, #tpu.memory_space<vmem>>, vector<64x8xbf16>,
    %c0_46 = arith.constant 0 : index
    %c0_47 = arith.constant 0 : index
    %c2_48 = arith.constant 2 : index
    %c2_49 = arith.constant 2 : index
    %c0_50 = arith.constant 0 : index
    %32 = vector.load %arg1[%c0_46, %c0_47, %c2_48, %c2_49, %c0_50] : memref<1x1x10x10x8xbf16, #tpu.memory_space<vmem>>, vector<1x1x8x8x8xbf16>
    %33 = vector.shape_cast %32 : vector<1x1x8x8x8xbf16> to vector<8x8x8xbf16>
    %34 = vector.shape_cast %33 : vector<8x8x8xbf16> to vector<64x8xbf16>
    %c0_51 = arith.constant 0 : index
    %c64 = arith.constant 64 : index
    %35 = vector.load %arg8[%c0_51, %c64] : memref<64x72xbf16, #tpu.memory_space<vmem>>, vector<64x8xbf16>
    tpu.vector_store %arg8[%c0_51, %c64], %34 {strides = array<i32>} : memref<64x72xbf16, #tpu.memory_space<vmem>>, vector<64x8xbf16>,
    %c0_52 = arith.constant 0 : index
    %c0_53 = arith.constant 0 : index
    %36 = vector.load %arg8[%c0_52, %c0_53] : memref<64x72xbf16, #tpu.memory_space<vmem>>, vector<64x72xbf16>
    %37 = arith.extf %36 : vector<64x72xbf16> to vector<64x72xf32>
    %c0_54 = arith.constant 0 : index
    %c0_55 = arith.constant 0 : index
    %38 = vector.load %arg3[%c0_54, %c0_55] : memref<1x72xf32, #tpu.memory_space<vmem>>, vector<1x72xf32>
    %39 = vector.broadcast %38 : vector<1x72xf32> to vector<64x72xf32>
    %40 = arith.mulf %37, %39 : vector<64x72xf32>
    %c0_56 = arith.constant 0 : index
    %c0_57 = arith.constant 0 : index
    %41 = vector.load %arg4[%c0_56, %c0_57] : memref<1x72xf32, #tpu.memory_space<vmem>>, vector<1x72xf32>
    %42 = vector.broadcast %41 : vector<1x72xf32> to vector<64x72xf32>
    %43 = arith.addf %40, %42 : vector<64x72xf32>
    %cst = arith.constant 0.000000e+00 : f32
    %44 = vector.broadcast %cst : f32 to vector<64x72xf32>
    %45 = arith.maximumf %43, %44 : vector<64x72xf32>
    %46 = arith.truncf %45 : vector<64x72xf32> to vector<64x72xbf16>
    %c0_58 = arith.constant 0 : index
    %c0_59 = arith.constant 0 : index
    %47 = vector.load %arg2[%c0_58, %c0_59] : memref<72x8xbf16, #tpu.memory_space<vmem>>, vector<72x8xbf16>
    %cst_60 = arith.constant dense<0.000000e+00> : vector<64x8xf32>
    %48 = tpu.matmul %46, %47, %cst_60 {dimension_numbers = #tpu.dot_dimension_numbers<[1], [0], [0], [1], [0, 0, 1, 1], [], []>} : vector<64x72xbf16>, vector<72x8xbf16>, vector<64x8xf32> -> vector<64x8xf32>
    %49 = arith.truncf %48 : vector<64x8xf32> to vector<64x8xbf16>
    %c0_61 = arith.constant 0 : index
    %c0_62 = arith.constant 0 : index
    %c0_63 = arith.constant 0 : index
    %50 = vector.load %arg5[%c0_61, %c0_62, %c0_63] : memref<1x64x8xbf16, #tpu.memory_space<vmem>>, vector<1x64x8xbf16>
    %51 = vector.shape_cast %50 : vector<1x64x8xbf16> to vector<64x8xbf16>
    %52 = vector.shape_cast %49 : vector<64x8xbf16> to vector<1x64x8xbf16>
    tpu.vector_store %arg5[%c0_61, %c0_62, %c0_63], %52 {strides = array<i32>} : memref<1x64x8xbf16, #tpu.memory_space<vmem>>, vector<1x64x8xbf16>,
    %cst_64 = arith.constant dense<0.000000e+00> : vector<8xf32>
    %53 = vector.multi_reduction <add>, %48, %cst_64 [0] : vector<64x8xf32> to vector<8xf32>
    %54 = vector.shape_cast %53 : vector<8xf32> to vector<1x8xf32>
    %c0_65 = arith.constant 0 : index
    %c0_66 = arith.constant 0 : index
    %c0_67 = arith.constant 0 : index
    %55 = vector.load %arg6[%c0_65, %c0_66, %c0_67] : memref<1x1x8xf32, #tpu.memory_space<vmem>>, vector<1x1x8xf32>
    %56 = vector.shape_cast %55 : vector<1x1x8xf32> to vector<1x8xf32>
    %57 = vector.shape_cast %54 : vector<1x8xf32> to vector<1x1x8xf32>
    tpu.vector_store %arg6[%c0_65, %c0_66, %c0_67], %57 {strides = array<i32>} : memref<1x1x8xf32, #tpu.memory_space<vmem>>, vector<1x1x8xf32>,
    %58 = arith.mulf %48, %48 : vector<64x8xf32>
    %cst_68 = arith.constant dense<0.000000e+00> : vector<8xf32>
    %59 = vector.multi_reduction <add>, %58, %cst_68 [0] : vector<64x8xf32> to vector<8xf32>
    %60 = vector.shape_cast %59 : vector<8xf32> to vector<1x8xf32>
    %c0_69 = arith.constant 0 : index
    %c0_70 = arith.constant 0 : index
    %c0_71 = arith.constant 0 : index
    %61 = vector.load %arg7[%c0_69, %c0_70, %c0_71] : memref<1x1x8xf32, #tpu.memory_space<vmem>>, vector<1x1x8xf32>
    %62 = vector.shape_cast %61 : vector<1x1x8xf32> to vector<1x8xf32>
    %63 = vector.shape_cast %60 : vector<1x8xf32> to vector<1x1x8xf32>
    tpu.vector_store %arg7[%c0_69, %c0_70, %c0_71], %63 {strides = array<i32>} : memref<1x1x8xf32, #tpu.memory_space<vmem>>, vector<1x1x8xf32>,
    return
  }
  func.func @transform_0(%arg0: i32) -> (i32, i32, i32, i32, i32) {
    %c0_i32 = arith.constant 0 : i32
    %c0_i32_0 = arith.constant 0 : i32
    %c0_i32_1 = arith.constant 0 : i32
    %c0_i32_2 = arith.constant 0 : i32
    %c0_i32_3 = arith.constant 0 : i32
    return %arg0, %c0_i32, %c0_i32_0, %c0_i32_1, %c0_i32_2 : i32, i32, i32, i32, i32
  }
  func.func @transform_1(%arg0: i32) -> (i32, i32) {
    %c0_i32 = arith.constant 0 : i32
    %c0_i32_0 = arith.constant 0 : i32
    %c0_i32_1 = arith.constant 0 : i32
    return %c0_i32, %c0_i32_0 : i32, i32
  }
  func.func @transform_2(%arg0: i32) -> (i32, i32) {
    %c0_i32 = arith.constant 0 : i32
    %c0_i32_0 = arith.constant 0 : i32
    %c0_i32_1 = arith.constant 0 : i32
    return %c0_i32, %c0_i32_0 : i32, i32
  }
  func.func @transform_3(%arg0: i32) -> (i32, i32) {
    %c0_i32 = arith.constant 0 : i32
    %c0_i32_0 = arith.constant 0 : i32
    %c0_i32_1 = arith.constant 0 : i32
    return %c0_i32, %c0_i32_0 : i32, i32
  }
  func.func @transform_4(%arg0: i32) -> (i32, i32, i32) {
    %c0_i32 = arith.constant 0 : i32
    %c0_i32_0 = arith.constant 0 : i32
    %c0_i32_1 = arith.constant 0 : i32
    return %arg0, %c0_i32, %c0_i32_0 : i32, i32, i32
  }
  func.func @transform_5(%arg0: i32) -> (i32, i32, i32) {
    %c0_i32 = arith.constant 0 : i32
    %c0_i32_0 = arith.constant 0 : i32
    %c0_i32_1 = arith.constant 0 : i32
    return %arg0, %c0_i32, %c0_i32_0 : i32, i32, i32
  }
  func.func @transform_6(%arg0: i32) -> (i32, i32, i32) {
    %c0_i32 = arith.constant 0 : i32
    %c0_i32_0 = arith.constant 0 : i32
    %c0_i32_1 = arith.constant 0 : i32
    return %arg0, %c0_i32, %c0_i32_0 : i32, i32, i32
  }
}

module attributes {stable_mosaic.version = 11 : i64} {
  func.func @_bn_act_kernel(%arg0: i32, %arg1: memref<8x128xbf16, #tpu.memory_space<vmem>>, %arg2: memref<1x128xf32, #tpu.memory_space<vmem>>, %arg3: memref<1x128xf32, #tpu.memory_space<vmem>>, %arg4: memref<8x128xbf16, #tpu.memory_space<vmem>>, %arg5: memref<1x128xf32, #tpu.memory_space<vmem>>, %arg6: memref<1x128xf32, #tpu.memory_space<vmem>>, %arg7: memref<8x128xf32, #tpu.memory_space<vmem>>) attributes {dimension_semantics = [#tpu.dimension_semantics<parallel>], iteration_bounds = array<i64: 1>, scalar_prefetch = 0 : i64, scratch_operands = 0 : i64, tpu.core_type = #tpu.core_type<tc>, window_params = [{transform_indices = @transform_0, window_bounds = array<i64: 8, 128>}, {pipeline_mode = #tpu.pipeline_mode<synchronous>, transform_indices = @transform_1, window_bounds = array<i64: 1, 128>}, {pipeline_mode = #tpu.pipeline_mode<synchronous>, transform_indices = @transform_2, window_bounds = array<i64: 1, 128>}, {transform_indices = @transform_3, window_bounds = array<i64: 8, 128>}, {pipeline_mode = #tpu.pipeline_mode<synchronous>, transform_indices = @transform_4, window_bounds = array<i64: 1, 128>}, {pipeline_mode = #tpu.pipeline_mode<synchronous>, transform_indices = @transform_5, window_bounds = array<i64: 1, 128>}, {transform_indices = @transform_6, window_bounds = array<i64: 8, 128>}]} {
    %c0 = arith.constant 0 : index
    %c0_0 = arith.constant 0 : index
    %0 = vector.load %arg1[%c0, %c0_0] : memref<8x128xbf16, #tpu.memory_space<vmem>>, vector<8x128xbf16>
    %1 = arith.extf %0 : vector<8x128xbf16> to vector<8x128xf32>
    %c0_1 = arith.constant 0 : index
    %c0_2 = arith.constant 0 : index
    %2 = vector.load %arg2[%c0_1, %c0_2] : memref<1x128xf32, #tpu.memory_space<vmem>>, vector<1x128xf32>
    %3 = vector.broadcast %2 : vector<1x128xf32> to vector<8x128xf32>
    %4 = arith.mulf %1, %3 : vector<8x128xf32>
    %c0_3 = arith.constant 0 : index
    %c0_4 = arith.constant 0 : index
    %5 = vector.load %arg3[%c0_3, %c0_4] : memref<1x128xf32, #tpu.memory_space<vmem>>, vector<1x128xf32>
    %6 = vector.broadcast %5 : vector<1x128xf32> to vector<8x128xf32>
    %7 = arith.addf %4, %6 : vector<8x128xf32>
    %cst = arith.constant 0.000000e+00 : f32
    %8 = vector.broadcast %cst : f32 to vector<8x128xf32>
    %9 = arith.maximumf %7, %8 : vector<8x128xf32>
    %c0_5 = arith.constant 0 : index
    %c0_6 = arith.constant 0 : index
    %10 = vector.load %arg4[%c0_5, %c0_6] : memref<8x128xbf16, #tpu.memory_space<vmem>>, vector<8x128xbf16>
    %11 = arith.extf %10 : vector<8x128xbf16> to vector<8x128xf32>
    %c0_7 = arith.constant 0 : index
    %c0_8 = arith.constant 0 : index
    %12 = vector.load %arg5[%c0_7, %c0_8] : memref<1x128xf32, #tpu.memory_space<vmem>>, vector<1x128xf32>
    %13 = vector.broadcast %12 : vector<1x128xf32> to vector<8x128xf32>
    %14 = arith.mulf %11, %13 : vector<8x128xf32>
    %c0_9 = arith.constant 0 : index
    %c0_10 = arith.constant 0 : index
    %15 = vector.load %arg6[%c0_9, %c0_10] : memref<1x128xf32, #tpu.memory_space<vmem>>, vector<1x128xf32>
    %16 = vector.broadcast %15 : vector<1x128xf32> to vector<8x128xf32>
    %17 = arith.addf %14, %16 : vector<8x128xf32>
    %18 = arith.addf %9, %17 : vector<8x128xf32>
    %c0_11 = arith.constant 0 : index
    %c0_12 = arith.constant 0 : index
    %19 = vector.load %arg7[%c0_11, %c0_12] : memref<8x128xf32, #tpu.memory_space<vmem>>, vector<8x128xf32>
    tpu.vector_store %arg7[%c0_11, %c0_12], %18 {strides = array<i32>} : memref<8x128xf32, #tpu.memory_space<vmem>>, vector<8x128xf32>,
    return
  }
  func.func @transform_0(%arg0: i32) -> (i32, i32) {
    %c0_i32 = arith.constant 0 : i32
    %c0_i32_0 = arith.constant 0 : i32
    return %arg0, %c0_i32 : i32, i32
  }
  func.func @transform_1(%arg0: i32) -> (i32, i32) {
    %c0_i32 = arith.constant 0 : i32
    %c0_i32_0 = arith.constant 0 : i32
    %c0_i32_1 = arith.constant 0 : i32
    return %c0_i32, %c0_i32_0 : i32, i32
  }
  func.func @transform_2(%arg0: i32) -> (i32, i32) {
    %c0_i32 = arith.constant 0 : i32
    %c0_i32_0 = arith.constant 0 : i32
    %c0_i32_1 = arith.constant 0 : i32
    return %c0_i32, %c0_i32_0 : i32, i32
  }
  func.func @transform_3(%arg0: i32) -> (i32, i32) {
    %c0_i32 = arith.constant 0 : i32
    %c0_i32_0 = arith.constant 0 : i32
    return %arg0, %c0_i32 : i32, i32
  }
  func.func @transform_4(%arg0: i32) -> (i32, i32) {
    %c0_i32 = arith.constant 0 : i32
    %c0_i32_0 = arith.constant 0 : i32
    %c0_i32_1 = arith.constant 0 : i32
    return %c0_i32, %c0_i32_0 : i32, i32
  }
  func.func @transform_5(%arg0: i32) -> (i32, i32) {
    %c0_i32 = arith.constant 0 : i32
    %c0_i32_0 = arith.constant 0 : i32
    %c0_i32_1 = arith.constant 0 : i32
    return %c0_i32, %c0_i32_0 : i32, i32
  }
  func.func @transform_6(%arg0: i32) -> (i32, i32) {
    %c0_i32 = arith.constant 0 : i32
    %c0_i32_0 = arith.constant 0 : i32
    return %arg0, %c0_i32 : i32, i32
  }
}

</mosaic_0001>

<llo_original>
// kernel: a_call__.7
$region0: #{a_call__.7}
  #allocation0 [shape = 'u32[]', space=smem, size = 0x4, offset = 0x4, fixed_abs, tag = 'smem constant byte address 0x4 - core index']
  #allocation1 [shape = 'u32[144,128]{1,0:T(1,128)}', space=vmem, size = 0x12000, scoped, tag = 'internal scratch']
  %s0 = inlined_call_operand.vmem [shape: bf16[8,128], index: 0, kind: input, shape index: {}]
  %s1 = inlined_call_operand.vmem [shape: f32[1,128], index: 1, kind: input, shape index: {}]
  %s2 = inlined_call_operand.vmem [shape: f32[1,128], index: 2, kind: input, shape index: {}]
  %s3 = inlined_call_operand.vmem [shape: bf16[8,128], index: 3, kind: input, shape index: {}]
  %s4 = inlined_call_operand.vmem [shape: f32[1,128], index: 4, kind: input, shape index: {}]
  %s5 = inlined_call_operand.vmem [shape: f32[1,128], index: 5, kind: input, shape index: {}]
  %s6 = inlined_call_operand.vmem [shape: f32[8,128], index: 6, kind: output, shape index: {}]
  %s7 = sld [smem:[#allocation0]]
  $region34: #{a_call__.7} parent=0
    _
  %s9 = ssub.s32 1, %s7
  %s10 = scalar_select 0, %s9, %s7
  // Predicated region
  $region2: #{a_call__.7} parent=0 // pred_check
    _
  $region3: #{a_call__.7} parent=0 // pred_check_branch
    %12 = sbr.rel (0) target = $region5
  $region4: #{a_call__.7} parent=0 // pred_region
    _
  $region5: #{a_call__.7} parent=0 // pred_fallthru
    _
  // Predicated region
  $region6: #{a_call__.7} parent=0 // pred_check
    _
  $region7: #{a_call__.7} parent=0 // pred_check_branch
    %14 = sbr.rel (0) target = $region9
  $region8: #{a_call__.7} parent=0 // pred_region
    _
  $region9: #{a_call__.7} parent=0 // pred_fallthru
    _
  // Predicated region
  $region10: #{a_call__.7} parent=0 // pred_check
    _
  $region11: #{a_call__.7} parent=0 // pred_check_branch
    %16 = sbr.rel (0) target = $region13
  $region12: #{a_call__.7} parent=0 // pred_region
    _
  $region13: #{a_call__.7} parent=0 // pred_fallthru
    _
  // Predicated region
  $region14: #{a_call__.7} parent=0 // pred_check
    _
  $region15: #{a_call__.7} parent=0 // pred_check_branch
    %18 = sbr.rel (0) target = $region17
  $region16: #{a_call__.7} parent=0 // pred_region
    _
  $region17: #{a_call__.7} parent=0 // pred_fallthru
    _
  // Predicated region
  $region18: #{a_call__.7} parent=0 // pred_check
    _
  $region19: #{a_call__.7} parent=0 // pred_check_branch
    %20 = sbr.rel (0) target = $region21
  $region20: #{a_call__.7} parent=0 // pred_region
    _
  $region21: #{a_call__.7} parent=0 // pred_fallthru
    _
  // Predicated region
  $region22: #{a_call__.7} parent=0 // pred_check
    _
  $region23: #{a_call__.7} parent=0 // pred_check_branch
    %22 = sbr.rel (0) target = $region25
  $region24: #{a_call__.7} parent=0 // pred_region
    _
  $region25: #{a_call__.7} parent=0 // pred_fallthru
    _
  %v23 = vld [vmem:[%s0] sm:$0xf]
  %v24 = vunpack.c.l.bf16 %v23
  %v25 = vld [vmem:[%s1] sm:$0x1]
  %v27 = vlaneseq
  %v28 = vshrl.u32 %v27, 7
  %v29 = vsub.s32 0, %v28
  %v30 = vrot.slane %v25, %v29
  %v32 = vmul.f32 %v24, %v30
  %v33 = vld [vmem:[%s2] sm:$0x1]
  %v35 = vlaneseq
  %v36 = vshrl.u32 %v35, 7
  %v37 = vsub.s32 0, %v36
  %v38 = vrot.slane %v33, %v37
  %v40 = vadd.f32 %v32, %v38
  %v41 = vmax.f32 %v40, 0.0
  %v42 = vld [vmem:[%s3] sm:$0xf]
  %v43 = vunpack.c.l.bf16 %v42
  %v44 = vld [vmem:[%s4] sm:$0x1]
  %v46 = vlaneseq
  %v47 = vshrl.u32 %v46, 7
  %v48 = vsub.s32 0, %v47
  %v49 = vrot.slane %v44, %v48
  %v51 = vmul.f32 %v43, %v49
  %v52 = vld [vmem:[%s5] sm:$0x1]
  %v54 = vlaneseq
  %v55 = vshrl.u32 %v54, 7
  %v56 = vsub.s32 0, %v55
  %v57 = vrot.slane %v52, %v56
  %v59 = vadd.f32 %v51, %v57
  %v60 = vadd.f32 %v41, %v59
  %61 = vst [vmem:[%s6] sm:$0xff] %v60
  // Predicated region
  $region26: #{a_call__.7} parent=0 // pred_check
    _
  $region27: #{a_call__.7} parent=0 // pred_check_branch
    %63 = sbr.rel (0) target = $region29
  $region28: #{a_call__.7} parent=0 // pred_region
    _
  $region29: #{a_call__.7} parent=0 // pred_fallthru
    _
  // Predicated region
  $region30: #{a_call__.7} parent=0 // pred_check
    _
  $region31: #{a_call__.7} parent=0 // pred_check_branch
    %65 = sbr.rel (0) target = $region33
  $region32: #{a_call__.7} parent=0 // pred_region
    _
  $region33: #{a_call__.7} parent=0 // pred_fallthru
    _

// kernel: a_call__.6
$region0: #{a_call__.6}
  #allocation0 [shape = 'u32[]', space=smem, size = 0x4, offset = 0x4, fixed_abs, tag = 'smem constant byte address 0x4 - core index']
  #allocation1 [shape = 'u32[144,128]{1,0:T(1,128)}', space=vmem, size = 0x12000, scoped, tag = 'internal scratch']
  #allocation2 [shape = 'bf16[64,36]{1,0:T(16,128)(2,1)}', space=vmem, size = 0x4000, scoped, tag = 'scratch operand']
  %s0 = inlined_call_operand.vmem [shape: bf16[2,4,9,9,4], index: 0, kind: input, shape index: {}]
  %s1 = inlined_call_operand.vmem [shape: bf16[36,8], index: 1, kind: input, shape index: {}]
  %s2 = inlined_call_operand.vmem [shape: bf16[2,64,8], index: 2, kind: output, shape index: {0}]
  %s3 = inlined_call_operand.vmem [shape: f32[2,1,8], index: 3, kind: output, shape index: {1}]
  %s4 = inlined_call_operand.vmem [shape: f32[2,1,8], index: 4, kind: output, shape index: {2}]
  %5 = xla_tuple %s2, %s3, %s4
  %s6 = sld [smem:[#allocation0]]
  $region57: #{a_call__.6} parent=0
    _
  %s8 = ssub.s32 1, %s6
  %s9 = scalar_select 0, %s8, %s6
  loop: start=0, step=1, limit=4
  $region2: #{a_call__.6} parent=0 // loop_pre_header
    _
  $region3: #{a_call__.6} parent=0 // loop_header
    %s11 = sphi 0, %s15
    %p12 = scmp.ge.s32.totalorder %s11, 4
    %s21 = sphi 0, %s23
    %s24 = sphi 0, %s21
    %s25 = sphi 0, %s24
    %s41 = sphi 0, %s25
    %s45 = sphi 0, %s45
    %s47 = sphi 0, %s45
    %s48 = sphi 0, %s47
    %s62 = sphi 0, %s48
    %s68 = sphi 0, %s70
    %s71 = sphi 0, %s68
    %s72 = sphi 0, %s71
    %s88 = sphi 0, %s72
    %s94 = sphi 0, %s96
    %s97 = sphi 0, %s94
    %s98 = sphi 0, %s97
    %s114 = sphi 0, %s98
    %s120 = sphi 0, %s122
    %s123 = sphi 0, %s120
    %s124 = sphi 0, %s123
    %s140 = sphi 0, %s124
  $region4: #{a_call__.6} parent=0 // loop_header_branch
    %14 = sbr.rel (%p12) target = $region8
  $region5: #{a_call__.6} parent=0 // loop_body
    %s16 = ssub.s32 %s11, 1
    %s17 = ssub.s32 %s11, 2
    %s18 = sadd.s32 %s11, 1
    %s19 = ssub.s32 %s11, %s18
    %p20 = scmp.eq.s32.totalorder %s19, 0
    %s22 = sadd.s32 %s21, 1
    %s23 = scalar_select %p20, %s21, %s22
    %p26 = pneg %p20
    %p27 = scmp.eq.s32.totalorder %s11, 1
    %p28 = por %p26, %p27
    %p29 = scmp.ne.s32.totalorder %s21, %s24
    %p30 = scmp.eq.s32.totalorder %s11, 0
    %p31 = por %p29, %p30
    %p32 = scmp.ne.s32.totalorder %s21, %s24
    %p33 = scmp.eq.s32.totalorder %s16, 1
    %p34 = por %p32, %p33
    %p35 = scmp.ne.s32.totalorder %s24, %s25
    %p36 = scmp.eq.s32.totalorder %s16, 0
    %p37 = por %p35, %p36
    %p38 = scmp.ne.s32.totalorder %s24, %s25
    %p39 = scmp.eq.s32.totalorder %s17, 1
    %p40 = por %p38, %p39
    %p42 = scmp.ne.s32.totalorder %s25, %s41
    %p43 = scmp.eq.s32.totalorder %s17, 0
    %p44 = por %p42, %p43
    %s46 = sadd.s32 %s45, 1
    %p49 = scmp.eq.s32.totalorder %s11, 1
    %p50 = scmp.ne.s32.totalorder %s45, %s47
    %p51 = scmp.eq.s32.totalorder %s11, 0
    %p52 = por %p50, %p51
    %p53 = scmp.ne.s32.totalorder %s45, %s47
    %p54 = scmp.eq.s32.totalorder %s16, 1
    %p55 = por %p53, %p54
    %p56 = scmp.ne.s32.totalorder %s47, %s48
    %p57 = scmp.eq.s32.totalorder %s16, 0
    %p58 = por %p56, %p57
    %p59 = scmp.ne.s32.totalorder %s47, %s48
    %p60 = scmp.eq.s32.totalorder %s17, 1
    %p61 = por %p59, %p60
    %p63 = scmp.ne.s32.totalorder %s48, %s62
    %p64 = scmp.eq.s32.totalorder %s17, 0
    %p65 = por %p63, %p64
    %s66 = ssub.s32 %s11, %s18
    %p67 = scmp.eq.s32.totalorder %s66, 0
    %s69 = sadd.s32 %s68, 1
    %s70 = scalar_select %p67, %s68, %s69
    %p73 = pneg %p67
    %p74 = scmp.eq.s32.totalorder %s11, 1
    %p75 = por %p73, %p74
    %p76 = scmp.ne.s32.totalorder %s68, %s71
    %p77 = scmp.eq.s32.totalorder %s11, 0
    %p78 = por %p76, %p77
    %p79 = scmp.ne.s32.totalorder %s68, %s71
    %p80 = scmp.eq.s32.totalorder %s16, 1
    %p81 = por %p79, %p80
    %p82 = scmp.ne.s32.totalorder %s71, %s72
    %p83 = scmp.eq.s32.totalorder %s16, 0
    %p84 = por %p82, %p83
    %p85 = scmp.ne.s32.totalorder %s71, %s72
    %p86 = scmp.eq.s32.totalorder %s17, 1
    %p87 = por %p85, %p86
    %p89 = scmp.ne.s32.totalorder %s72, %s88
    %p90 = scmp.eq.s32.totalorder %s17, 0
    %p91 = por %p89, %p90
    %s92 = ssub.s32 %s11, %s18
    %p93 = scmp.eq.s32.totalorder %s92, 0
    %s95 = sadd.s32 %s94, 1
    %s96 = scalar_select %p93, %s94, %s95
    %p99 = pneg %p93
    %p100 = scmp.eq.s32.totalorder %s11, 1
    %p101 = por %p99, %p100
    %p102 = scmp.ne.s32.totalorder %s94, %s97
    %p103 = scmp.eq.s32.totalorder %s11, 0
    %p104 = por %p102, %p103
    %p105 = scmp.ne.s32.totalorder %s94, %s97
    %p106 = scmp.eq.s32.totalorder %s16, 1
    %p107 = por %p105, %p106
    %p108 = scmp.ne.s32.totalorder %s97, %s98
    %p109 = scmp.eq.s32.totalorder %s16, 0
    %p110 = por %p108, %p109
    %p111 = scmp.ne.s32.totalorder %s97, %s98
    %p112 = scmp.eq.s32.totalorder %s17, 1
    %p113 = por %p111, %p112
    %p115 = scmp.ne.s32.totalorder %s98, %s114
    %p116 = scmp.eq.s32.totalorder %s17, 0
    %p117 = por %p115, %p116
    %s118 = ssub.s32 %s11, %s18
    %p119 = scmp.eq.s32.totalorder %s118, 0
    %s121 = sadd.s32 %s120, 1
    %s122 = scalar_select %p119, %s120, %s121
    %p125 = pneg %p119
    %p126 = scmp.eq.s32.totalorder %s11, 1
    %p127 = por %p125, %p126
    %p128 = scmp.ne.s32.totalorder %s120, %s123
    %p129 = scmp.eq.s32.totalorder %s11, 0
    %p130 = por %p128, %p129
    %p131 = scmp.ne.s32.totalorder %s120, %s123
    %p132 = scmp.eq.s32.totalorder %s16, 1
    %p133 = por %p131, %p132
    %p134 = scmp.ne.s32.totalorder %s123, %s124
    %p135 = scmp.eq.s32.totalorder %s16, 0
    %p136 = por %p134, %p135
    %p137 = scmp.ne.s32.totalorder %s123, %s124
    %p138 = scmp.eq.s32.totalorder %s17, 1
    %p139 = por %p137, %p138
    %p141 = scmp.ne.s32.totalorder %s124, %s140
    %p142 = scmp.eq.s32.totalorder %s17, 0
    %p143 = por %p141, %p142
    %p144 = scmp.le.s32.totalorder 1, %s11
    %p145 = scmp.lt.s32.totalorder %s11, 3
    %p146 = pnand %p144, %p145
    %p147 = pneg %p146
    // Predicated region
    $region9: #{a_call__.6} parent=5 // pred_check
      _
    $region10: #{a_call__.6} parent=5 // pred_check_branch
      %149 = sbr.rel (%p146) target = $region12
    $region11: #{a_call__.6} parent=5 // pred_region
      %s150 = ssub.s32 %s11, 1
      // Predicated region
      $region13: #{a_call__.6} parent=11 // pred_check
        %p151 = pneg %p58
      $region14: #{a_call__.6} parent=11 // pred_check_branch
        %153 = sbr.rel (%p151) target = $region16
      $region15: #{a_call__.6} parent=11 // pred_region
        _
      $region16: #{a_call__.6} parent=11 // pred_fallthru
        _
    $region12: #{a_call__.6} parent=5 // pred_fallthru
      _
    %p154 = scmp.lt.s32.totalorder %s11, 2
    // Predicated region
    $region17: #{a_call__.6} parent=5 // pred_check
      %p155 = pneg %p154
    $region18: #{a_call__.6} parent=5 // pred_check_branch
      %157 = sbr.rel (%p155) target = $region20
    $region19: #{a_call__.6} parent=5 // pred_region
      // Predicated region
      $region21: #{a_call__.6} parent=19 // pred_check
        %p158 = pneg %p31
      $region22: #{a_call__.6} parent=19 // pred_check_branch
        %160 = sbr.rel (%p158) target = $region24
      $region23: #{a_call__.6} parent=19 // pred_region
        %p161 = scmp.lt.s32.totalorder %s11, 1
        %s162 = scalar_select %p161, %s11, 1
        %s163 = smul.addr %s162, 72
        %s164 = smul.addr %s163, 4
        %s165 = scalar_lea.vmem %s0, %s164
      $region24: #{a_call__.6} parent=19 // pred_fallthru
        _
    $region20: #{a_call__.6} parent=5 // pred_fallthru
      _
    %p166 = scmp.le.s32.totalorder 1, %s11
    %p167 = scmp.lt.s32.totalorder %s11, 3
    %p168 = pnand %p166, %p167
    %p169 = pneg %p168
    // Predicated region
    $region25: #{a_call__.6} parent=5 // pred_check
      _
    $region26: #{a_call__.6} parent=5 // pred_check_branch
      %171 = sbr.rel (%p168) target = $region28
    $region27: #{a_call__.6} parent=5 // pred_region
      %s172 = ssub.s32 %s11, 1
      %p173 = scmp.lt.s32.totalorder %s16, 1
      %s174 = scalar_select %p173, %s16, 1
      %s175 = smul.addr %s174, 72
      %s176 = smul.addr %s175, 4
      %s177 = scalar_lea.vmem %s0, %s176
      %p178 = pneg %p37
      %p179 = pneg %p34
      %p180 = pneg %p58
      %p181 = pneg %p55
      %p182 = pneg %p84
      %p183 = pneg %p81
      %p184 = scmp.lt.s32.totalorder %s16, 1
      %s185 = scalar_select %p184, %s16, 1
      %s186 = smul.addr %s185, 8
      %s187 = smul.addr %s186, 4
      %s188 = scalar_lea.vmem %s2, %s187
      %p189 = pneg %p110
      %p190 = pneg %p107
      %p191 = scmp.lt.s32.totalorder %s16, 1
      %s192 = scalar_select %p191, %s16, 1
      %s193 = scalar_lea.vmem %s3, %s192
      %p194 = pneg %p136
      %p195 = pneg %p133
      %p196 = scmp.lt.s32.totalorder %s16, 1
      %s197 = scalar_select %p196, %s16, 1
      %s198 = scalar_lea.vmem %s4, %s197
      %p199 = scmp.lt.s32.totalorder %s16, 1
      %s200 = scalar_select %p199, %s16, 1
      %s201 = smul.addr %s200, 72
      %s202 = smul.addr %s201, 4
      %s203 = scalar_lea.vmem %s0, %s202
      %p204 = scmp.lt.s32.totalorder %s16, 1
      %s205 = scalar_select %p204, %s16, 1
      %s206 = smul.addr %s205, 8
      %s207 = smul.addr %s206, 4
      %s208 = scalar_lea.vmem %s2, %s207
      %p209 = scmp.lt.s32.totalorder %s16, 1
      %s210 = scalar_select %p209, %s16, 1
      %s211 = scalar_lea.vmem %s3, %s210
      %p212 = scmp.lt.s32.totalorder %s16, 1
      %s213 = scalar_select %p212, %s16, 1
      %s214 = scalar_lea.vmem %s4, %s213
      %v216 = vld [vmem:[%s203] sm:$0xf]
      %v217 = vld [vmem:[%s203 + $0x8] sm:$0xf]
      %v218 = vld [vmem:[%s203 + $0x10] sm:$0xf]
      %v219 = vld [vmem:[%s203 + $0x18] sm:$0xf]
      %v220 = vld [vmem:[%s203 + $0x20] sm:$0xf]
      %v221 = vld [vmem:[%s203 + $0x28] sm:$0xf]
      %v222 = vld [vmem:[%s203 + $0x30] sm:$0xf]
      %v223 = vld [vmem:[%s203 + $0x38] sm:$0xf]
      %v232 = vunpack.c.l.b16 %v216
      %v233 = vunpack.c.l.b16 %v217
      %v234 = vunpack.c.l.b16 %v218
      %v235 = vunpack.c.l.b16 %v219
      %v236 = vunpack.c.l.b16 %v220
      %v237 = vunpack.c.l.b16 %v221
      %v238 = vunpack.c.l.b16 %v222
      %v239 = vunpack.c.l.b16 %v223
      %v240 = vpack.c.b16 %v233, %v232
      %v241 = vpack.c.b16 %v235, %v234
      %v242 = vpack.c.b16 %v237, %v236
      %v243 = vpack.c.b16 %v239, %v238
      %vm248 = vcmask 31744
      %249 = vst.msk [vmem:[#allocation2] sm:$0xff] %vm248, %v240
      %250 = vst.msk [vmem:[#allocation2 + $0x8] sm:$0xff] %vm248, %v241
      %251 = vst.msk [vmem:[#allocation2 + $0x10] sm:$0xff] %vm248, %v242
      %252 = vst.msk [vmem:[#allocation2 + $0x18] sm:$0xff] %vm248, %v243
      %s253 = scalar_lea.vmem %s203, 72
      %v254 = vld [vmem:[%s253] sm:$0xf]
      %v255 = vld [vmem:[%s253 + $0x8] sm:$0xf]
      %v256 = vld [vmem:[%s253 + $0x10] sm:$0xf]
      %v257 = vld [vmem:[%s253 + $0x18] sm:$0xf]
      %v258 = vld [vmem:[%s253 + $0x20] sm:$0xf]
      %v259 = vld [vmem:[%s253 + $0x28] sm:$0xf]
      %v260 = vld [vmem:[%s253 + $0x30] sm:$0xf]
      %v261 = vld [vmem:[%s253 + $0x38] sm:$0xf]
      %v270 = vunpack.c.l.b16 %v254
      %v271 = vunpack.c.l.b16 %v255
      %v272 = vunpack.c.l.b16 %v256
      %v273 = vunpack.c.l.b16 %v257
      %v274 = vunpack.c.l.b16 %v258
      %v275 = vunpack.c.l.b16 %v259
      %v276 = vunpack.c.l.b16 %v260
      %v277 = vunpack.c.l.b16 %v261
      %v278 = vpack.c.b16 %v271, %v270
      %v279 = vpack.c.b16 %v273, %v272
      %v280 = vpack.c.b16 %v275, %v274
      %v281 = vpack.c.b16 %v277, %v276
      %282 = vrot.lane.b32.xlu0 %v278, 4
      %v283 = vpop.permute.xlu0 %282
      %284 = vrot.lane.b32.xlu0 %v279, 4
      %v285 = vpop.permute.xlu0 %284
      %286 = vrot.lane.b32.xlu0 %v280, 4
      %v287 = vpop.permute.xlu0 %286
      %288 = vrot.lane.b32.xlu0 %v281, 4
      %v289 = vpop.permute.xlu0 %288
      %vm294 = vcmask 64544
      %295 = vst.msk [vmem:[#allocation2] sm:$0xff] %vm294, %v283
      %296 = vst.msk [vmem:[#allocation2 + $0x8] sm:$0xff] %vm294, %v285
      %297 = vst.msk [vmem:[#allocation2 + $0x10] sm:$0xff] %vm294, %v287
      %298 = vst.msk [vmem:[#allocation2 + $0x18] sm:$0xff] %vm294, %v289
      %v299 = vld [vmem:[%s203] sm:$0xf]
      %v300 = vld [vmem:[%s203 + $0x4] sm:$0x1]
      %v301 = vld [vmem:[%s203 + $0x8] sm:$0xf]
      %v302 = vld [vmem:[%s203 + $0xc] sm:$0x1]
      %v303 = vld [vmem:[%s203 + $0x10] sm:$0xf]
      %v304 = vld [vmem:[%s203 + $0x14] sm:$0x1]
      %v305 = vld [vmem:[%s203 + $0x18] sm:$0xf]
      %v306 = vld [vmem:[%s203 + $0x1c] sm:$0x1]
      %v307 = vld [vmem:[%s203 + $0x20] sm:$0xf]
      %v308 = vld [vmem:[%s203 + $0x24] sm:$0x1]
      %v309 = vld [vmem:[%s203 + $0x28] sm:$0xf]
      %v310 = vld [vmem:[%s203 + $0x2c] sm:$0x1]
      %v311 = vld [vmem:[%s203 + $0x30] sm:$0xf]
      %v312 = vld [vmem:[%s203 + $0x34] sm:$0x1]
      %v313 = vld [vmem:[%s203 + $0x38] sm:$0xf]
      %v314 = vld [vmem:[%s203 + $0x3c] sm:$0x1]
      %vm315 = vsmask.f32 3328
      %vm316 = vsmask.f32 7440
      %vm317 = vmor %vm315, %vm316
      %v319 = vshrl.u32 %v299, 16
      %v321 = vrot.slane %v319, 4
      %v322 = vshll.u32 %v299, 16
      %v324 = vrot.slane %v322, 5
      %v325 = vor.u32 %v321, %v324
      %v326 = vrot.slane %v325, 4
      %v328 = vshll.u32 %v300, 16
      %v330 = vrot.slane %v328, 5
      %v331 = vsel %vm317, %v326, %v330
      %v333 = vshrl.u32 %v301, 16
      %v335 = vrot.slane %v333, 4
      %v336 = vshll.u32 %v301, 16
      %v338 = vrot.slane %v336, 5
      %v339 = vor.u32 %v335, %v338
      %v340 = vrot.slane %v339, 4
      %v342 = vshll.u32 %v302, 16
      %v344 = vrot.slane %v342, 5
      %v345 = vsel %vm317, %v340, %v344
      %v347 = vshrl.u32 %v303, 16
      %v349 = vrot.slane %v347, 4
      %v350 = vshll.u32 %v303, 16
      %v352 = vrot.slane %v350, 5
      %v353 = vor.u32 %v349, %v352
      %v354 = vrot.slane %v353, 4
      %v356 = vshll.u32 %v304, 16
      %v358 = vrot.slane %v356, 5
      %v359 = vsel %vm317, %v354, %v358
      %v361 = vshrl.u32 %v305, 16
      %v363 = vrot.slane %v361, 4
      %v364 = vshll.u32 %v305, 16
      %v366 = vrot.slane %v364, 5
      %v367 = vor.u32 %v363, %v366
      %v368 = vrot.slane %v367, 4
      %v370 = vshll.u32 %v306, 16
      %v372 = vrot.slane %v370, 5
      %v373 = vsel %vm317, %v368, %v372
      %v375 = vshrl.u32 %v307, 16
      %v377 = vrot.slane %v375, 4
      %v378 = vshll.u32 %v307, 16
      %v380 = vrot.slane %v378, 5
      %v381 = vor.u32 %v377, %v380
      %v382 = vrot.slane %v381, 4
      %v384 = vshll.u32 %v308, 16
      %v386 = vrot.slane %v384, 5
      %v387 = vsel %vm317, %v382, %v386
      %v389 = vshrl.u32 %v309, 16
      %v391 = vrot.slane %v389, 4
      %v392 = vshll.u32 %v309, 16
      %v394 = vrot.slane %v392, 5
      %v395 = vor.u32 %v391, %v394
      %v396 = vrot.slane %v395, 4
      %v398 = vshll.u32 %v310, 16
      %v400 = vrot.slane %v398, 5
      %v401 = vsel %vm317, %v396, %v400
      %v403 = vshrl.u32 %v311, 16
      %v405 = vrot.slane %v403, 4
      %v406 = vshll.u32 %v311, 16
      %v408 = vrot.slane %v406, 5
      %v409 = vor.u32 %v405, %v408
      %v410 = vrot.slane %v409, 4
      %v412 = vshll.u32 %v312, 16
      %v414 = vrot.slane %v412, 5
      %v415 = vsel %vm317, %v410, %v414
      %v417 = vshrl.u32 %v313, 16
      %v419 = vrot.slane %v417, 4
      %v420 = vshll.u32 %v313, 16
      %v422 = vrot.slane %v420, 5
      %v423 = vor.u32 %v419, %v422
      %v424 = vrot.slane %v423, 4
      %v426 = vshll.u32 %v314, 16
      %v428 = vrot.slane %v426, 5
      %v429 = vsel %vm317, %v424, %v428
      %v430 = vunpack.c.l.b16 %v331
      %v431 = vunpack.c.l.b16 %v345
      %v432 = vunpack.c.l.b16 %v359
      %v433 = vunpack.c.l.b16 %v373
      %v434 = vunpack.c.l.b16 %v387
      %v435 = vunpack.c.l.b16 %v401
      %v436 = vunpack.c.l.b16 %v415
      %v437 = vunpack.c.l.b16 %v429
      %v438 = vpack.c.b16 %v431, %v430
      %v439 = vpack.c.b16 %v433, %v432
      %v440 = vpack.c.b16 %v435, %v434
      %v441 = vpack.c.b16 %v437, %v436
      %442 = vrot.lane.b32.xlu0 %v438, 8
      %v443 = vpop.permute.xlu0 %442
      %444 = vrot.lane.b32.xlu0 %v439, 8
      %v445 = vpop.permute.xlu0 %444
      %446 = vrot.lane.b32.xlu0 %v440, 8
      %v447 = vpop.permute.xlu0 %446
      %448 = vrot.lane.b32.xlu0 %v441, 8
      %v449 = vpop.permute.xlu0 %448
      %vm454 = vcmask 97344
      %455 = vst.msk [vmem:[#allocation2] sm:$0xff] %vm454, %v443
      %456 = vst.msk [vmem:[#allocation2 + $0x8] sm:$0xff] %vm454, %v445
      %457 = vst.msk [vmem:[#allocation2 + $0x10] sm:$0xff] %vm454, %v447
      %458 = vst.msk [vmem:[#allocation2 + $0x18] sm:$0xff] %vm454, %v449
      %s459 = scalar_lea.vmem %s203, 144
      %v460 = vld [vmem:[%s459] sm:$0xf]
      %v461 = vld [vmem:[%s459 + $0x8] sm:$0xf]
      %v462 = vld [vmem:[%s459 + $0x10] sm:$0xf]
      %v463 = vld [vmem:[%s459 + $0x18] sm:$0xf]
      %v464 = vld [vmem:[%s459 + $0x20] sm:$0xf]
      %v465 = vld [vmem:[%s459 + $0x28] sm:$0xf]
      %v466 = vld [vmem:[%s459 + $0x30] sm:$0xf]
      %v467 = vld [vmem:[%s459 + $0x38] sm:$0xf]
      %v476 = vunpack.c.l.b16 %v460
      %v477 = vunpack.c.l.b16 %v461
      %v478 = vunpack.c.l.b16 %v462
      %v479 = vunpack.c.l.b16 %v463
      %v480 = vunpack.c.l.b16 %v464
      %v481 = vunpack.c.l.b16 %v465
      %v482 = vunpack.c.l.b16 %v466
      %v483 = vunpack.c.l.b16 %v467
      %v484 = vpack.c.b16 %v477, %v476
      %v485 = vpack.c.b16 %v479, %v478
      %v486 = vpack.c.b16 %v481, %v480
      %v487 = vpack.c.b16 %v483, %v482
      %488 = vrot.lane.b32.xlu0 %v484, 12
      %v489 = vpop.permute.xlu0 %488
      %490 = vrot.lane.b32.xlu0 %v485, 12
      %v491 = vpop.permute.xlu0 %490
      %492 = vrot.lane.b32.xlu0 %v486, 12
      %v493 = vpop.permute.xlu0 %492
      %494 = vrot.lane.b32.xlu0 %v487, 12
      %v495 = vpop.permute.xlu0 %494
      %vm500 = vcmask 130144
      %501 = vst.msk [vmem:[#allocation2] sm:$0xff] %vm500, %v489
      %502 = vst.msk [vmem:[#allocation2 + $0x8] sm:$0xff] %vm500, %v491
      %503 = vst.msk [vmem:[#allocation2 + $0x10] sm:$0xff] %vm500, %v493
      %504 = vst.msk [vmem:[#allocation2 + $0x18] sm:$0xff] %vm500, %v495
      %s505 = scalar_lea.vmem %s203, 216
      %v506 = vld [vmem:[%s505] sm:$0xf]
      %v507 = vld [vmem:[%s505 + $0x8] sm:$0xf]
      %v508 = vld [vmem:[%s505 + $0x10] sm:$0xf]
      %v509 = vld [vmem:[%s505 + $0x18] sm:$0xf]
      %v510 = vld [vmem:[%s505 + $0x20] sm:$0xf]
      %v511 = vld [vmem:[%s505 + $0x28] sm:$0xf]
      %v512 = vld [vmem:[%s505 + $0x30] sm:$0xf]
      %v513 = vld [vmem:[%s505 + $0x38] sm:$0xf]
      %v522 = vunpack.c.l.b16 %v506
      %v523 = vunpack.c.l.b16 %v507
      %v524 = vunpack.c.l.b16 %v508
      %v525 = vunpack.c.l.b16 %v509
      %v526 = vunpack.c.l.b16 %v510
      %v527 = vunpack.c.l.b16 %v511
      %v528 = vunpack.c.l.b16 %v512
      %v529 = vunpack.c.l.b16 %v513
      %v530 = vpack.c.b16 %v523, %v522
      %v531 = vpack.c.b16 %v525, %v524
      %v532 = vpack.c.b16 %v527, %v526
      %v533 = vpack.c.b16 %v529, %v528
      %534 = vrot.lane.b32.xlu0 %v530, 16
      %v535 = vpop.permute.xlu0 %534
      %536 = vrot.lane.b32.xlu0 %v531, 16
      %v537 = vpop.permute.xlu0 %536
      %538 = vrot.lane.b32.xlu0 %v532, 16
      %v539 = vpop.permute.xlu0 %538
      %540 = vrot.lane.b32.xlu0 %v533, 16
      %v541 = vpop.permute.xlu0 %540
      %vm546 = vcmask 162944
      %547 = vst.msk [vmem:[#allocation2] sm:$0xff] %vm546, %v535
      %548 = vst.msk [vmem:[#allocation2 + $0x8] sm:$0xff] %vm546, %v537
      %549 = vst.msk [vmem:[#allocation2 + $0x10] sm:$0xff] %vm546, %v539
      %550 = vst.msk [vmem:[#allocation2 + $0x18] sm:$0xff] %vm546, %v541
      %v551 = vld [vmem:[%s459] sm:$0xf]
      %v552 = vld [vmem:[%s459 + $0x4] sm:$0x1]
      %v553 = vld [vmem:[%s459 + $0x8] sm:$0xf]
      %v554 = vld [vmem:[%s459 + $0xc] sm:$0x1]
      %v555 = vld [vmem:[%s459 + $0x10] sm:$0xf]
      %v556 = vld [vmem:[%s459 + $0x14] sm:$0x1]
      %v557 = vld [vmem:[%s459 + $0x18] sm:$0xf]
      %v558 = vld [vmem:[%s459 + $0x1c] sm:$0x1]
      %v559 = vld [vmem:[%s459 + $0x20] sm:$0xf]
      %v560 = vld [vmem:[%s459 + $0x24] sm:$0x1]
      %v561 = vld [vmem:[%s459 + $0x28] sm:$0xf]
      %v562 = vld [vmem:[%s459 + $0x2c] sm:$0x1]
      %v563 = vld [vmem:[%s459 + $0x30] sm:$0xf]
      %v564 = vld [vmem:[%s459 + $0x34] sm:$0x1]
      %v565 = vld [vmem:[%s459 + $0x38] sm:$0xf]
      %v566 = vld [vmem:[%s459 + $0x3c] sm:$0x1]
      %v568 = vshrl.u32 %v551, 16
      %v570 = vrot.slane %v568, 4
      %v571 = vshll.u32 %v551, 16
      %v573 = vrot.slane %v571, 5
      %v574 = vor.u32 %v570, %v573
      %v575 = vrot.slane %v574, 4
      %v577 = vshll.u32 %v552, 16
      %v579 = vrot.slane %v577, 5
      %v580 = vsel %vm317, %v575, %v579
      %v582 = vshrl.u32 %v553, 16
      %v584 = vrot.slane %v582, 4
      %v585 = vshll.u32 %v553, 16
      %v587 = vrot.slane %v585, 5
      %v588 = vor.u32 %v584, %v587
      %v589 = vrot.slane %v588, 4
      %v591 = vshll.u32 %v554, 16
      %v593 = vrot.slane %v591, 5
      %v594 = vsel %vm317, %v589, %v593
      %v596 = vshrl.u32 %v555, 16
      %v598 = vrot.slane %v596, 4
      %v599 = vshll.u32 %v555, 16
      %v601 = vrot.slane %v599, 5
      %v602 = vor.u32 %v598, %v601
      %v603 = vrot.slane %v602, 4
      %v605 = vshll.u32 %v556, 16
      %v607 = vrot.slane %v605, 5
      %v608 = vsel %vm317, %v603, %v607
      %v610 = vshrl.u32 %v557, 16
      %v612 = vrot.slane %v610, 4
      %v613 = vshll.u32 %v557, 16
      %v615 = vrot.slane %v613, 5
      %v616 = vor.u32 %v612, %v615
      %v617 = vrot.slane %v616, 4
      %v619 = vshll.u32 %v558, 16
      %v621 = vrot.slane %v619, 5
      %v622 = vsel %vm317, %v617, %v621
      %v624 = vshrl.u32 %v559, 16
      %v626 = vrot.slane %v624, 4
      %v627 = vshll.u32 %v559, 16
      %v629 = vrot.slane %v627, 5
      %v630 = vor.u32 %v626, %v629
      %v631 = vrot.slane %v630, 4
      %v633 = vshll.u32 %v560, 16
      %v635 = vrot.slane %v633, 5
      %v636 = vsel %vm317, %v631, %v635
      %v638 = vshrl.u32 %v561, 16
      %v640 = vrot.slane %v638, 4
      %v641 = vshll.u32 %v561, 16
      %v643 = vrot.slane %v641, 5
      %v644 = vor.u32 %v640, %v643
      %v645 = vrot.slane %v644, 4
      %v647 = vshll.u32 %v562, 16
      %v649 = vrot.slane %v647, 5
      %v650 = vsel %vm317, %v645, %v649
      %v652 = vshrl.u32 %v563, 16
      %v654 = vrot.slane %v652, 4
      %v655 = vshll.u32 %v563, 16
      %v657 = vrot.slane %v655, 5
      %v658 = vor.u32 %v654, %v657
      %v659 = vrot.slane %v658, 4
      %v661 = vshll.u32 %v564, 16
      %v663 = vrot.slane %v661, 5
      %v664 = vsel %vm317, %v659, %v663
      %v666 = vshrl.u32 %v565, 16
      %v668 = vrot.slane %v666, 4
      %v669 = vshll.u32 %v565, 16
      %v671 = vrot.slane %v669, 5
      %v672 = vor.u32 %v668, %v671
      %v673 = vrot.slane %v672, 4
      %v675 = vshll.u32 %v566, 16
      %v677 = vrot.slane %v675, 5
      %v678 = vsel %vm317, %v673, %v677
      %v679 = vunpack.c.l.b16 %v580
      %v680 = vunpack.c.l.b16 %v594
      %v681 = vunpack.c.l.b16 %v608
      %v682 = vunpack.c.l.b16 %v622
      %v683 = vunpack.c.l.b16 %v636
      %v684 = vunpack.c.l.b16 %v650
      %v685 = vunpack.c.l.b16 %v664
      %v686 = vunpack.c.l.b16 %v678
      %v687 = vpack.c.b16 %v680, %v679
      %v688 = vpack.c.b16 %v682, %v681
      %v689 = vpack.c.b16 %v684, %v683
      %v690 = vpack.c.b16 %v686, %v685
      %691 = vrot.lane.b32.xlu0 %v687, 20
      %v692 = vpop.permute.xlu0 %691
      %693 = vrot.lane.b32.xlu0 %v688, 20
      %v694 = vpop.permute.xlu0 %693
      %695 = vrot.lane.b32.xlu0 %v689, 20
      %v696 = vpop.permute.xlu0 %695
      %697 = vrot.lane.b32.xlu0 %v690, 20
      %v698 = vpop.permute.xlu0 %697
      %vm703 = vcmask 195744
      %704 = vst.msk [vmem:[#allocation2] sm:$0xff] %vm703, %v692
      %705 = vst.msk [vmem:[#allocation2 + $0x8] sm:$0xff] %vm703, %v694
      %706 = vst.msk [vmem:[#allocation2 + $0x10] sm:$0xff] %vm703, %v696
      %707 = vst.msk [vmem:[#allocation2 + $0x18] sm:$0xff] %vm703, %v698
      %s708 = scalar_lea.vmem %s203, 8
      %v709 = vld [vmem:[%s708] sm:$0xf]
      %v710 = vld [vmem:[%s708 + $0x8] sm:$0xf]
      %v711 = vld [vmem:[%s708 + $0x10] sm:$0xf]
      %v712 = vld [vmem:[%s708 + $0x18] sm:$0xf]
      %v713 = vld [vmem:[%s708 + $0x20] sm:$0xf]
      %v714 = vld [vmem:[%s708 + $0x28] sm:$0xf]
      %v715 = vld [vmem:[%s708 + $0x30] sm:$0xf]
      %v716 = vld [vmem:[%s708 + $0x38] sm:$0xf]
      %v725 = vunpack.c.l.b16 %v709
      %v726 = vunpack.c.l.b16 %v710
      %v727 = vunpack.c.l.b16 %v711
      %v728 = vunpack.c.l.b16 %v712
      %v729 = vunpack.c.l.b16 %v713
      %v730 = vunpack.c.l.b16 %v714
      %v731 = vunpack.c.l.b16 %v715
      %v732 = vunpack.c.l.b16 %v716
      %v733 = vpack.c.b16 %v726, %v725
      %v734 = vpack.c.b16 %v728, %v727
      %v735 = vpack.c.b16 %v730, %v729
      %v736 = vpack.c.b16 %v732, %v731
      %737 = vrot.lane.b32.xlu0 %v733, 24
      %v738 = vpop.permute.xlu0 %737
      %739 = vrot.lane.b32.xlu0 %v734, 24
      %v740 = vpop.permute.xlu0 %739
      %741 = vrot.lane.b32.xlu0 %v735, 24
      %v742 = vpop.permute.xlu0 %741
      %743 = vrot.lane.b32.xlu0 %v736, 24
      %v744 = vpop.permute.xlu0 %743
      %vm749 = vcmask 228544
      %750 = vst.msk [vmem:[#allocation2] sm:$0xff] %vm749, %v738
      %751 = vst.msk [vmem:[#allocation2 + $0x8] sm:$0xff] %vm749, %v740
      %752 = vst.msk [vmem:[#allocation2 + $0x10] sm:$0xff] %vm749, %v742
      %753 = vst.msk [vmem:[#allocation2 + $0x18] sm:$0xff] %vm749, %v744
      %s754 = scalar_lea.vmem %s203, 80
      %v755 = vld [vmem:[%s754] sm:$0xf]
      %v756 = vld [vmem:[%s754 + $0x8] sm:$0xf]
      %v757 = vld [vmem:[%s754 + $0x10] sm:$0xf]
      %v758 = vld [vmem:[%s754 + $0x18] sm:$0xf]
      %v759 = vld [vmem:[%s754 + $0x20] sm:$0xf]
      %v760 = vld [vmem:[%s754 + $0x28] sm:$0xf]
      %v761 = vld [vmem:[%s754 + $0x30] sm:$0xf]
      %v762 = vld [vmem:[%s754 + $0x38] sm:$0xf]
      %v771 = vunpack.c.l.b16 %v755
      %v772 = vunpack.c.l.b16 %v756
      %v773 = vunpack.c.l.b16 %v757
      %v774 = vunpack.c.l.b16 %v758
      %v775 = vunpack.c.l.b16 %v759
      %v776 = vunpack.c.l.b16 %v760
      %v777 = vunpack.c.l.b16 %v761
      %v778 = vunpack.c.l.b16 %v762
      %v779 = vpack.c.b16 %v772, %v771
      %v780 = vpack.c.b16 %v774, %v773
      %v781 = vpack.c.b16 %v776, %v775
      %v782 = vpack.c.b16 %v778, %v777
      %783 = vrot.lane.b32.xlu0 %v779, 28
      %v784 = vpop.permute.xlu0 %783
      %785 = vrot.lane.b32.xlu0 %v780, 28
      %v786 = vpop.permute.xlu0 %785
      %787 = vrot.lane.b32.xlu0 %v781, 28
      %v788 = vpop.permute.xlu0 %787
      %789 = vrot.lane.b32.xlu0 %v782, 28
      %v790 = vpop.permute.xlu0 %789
      %vm795 = vcmask 261344
      %796 = vst.msk [vmem:[#allocation2] sm:$0xff] %vm795, %v784
      %797 = vst.msk [vmem:[#allocation2 + $0x8] sm:$0xff] %vm795, %v786
      %798 = vst.msk [vmem:[#allocation2 + $0x10] sm:$0xff] %vm795, %v788
      %799 = vst.msk [vmem:[#allocation2 + $0x18] sm:$0xff] %vm795, %v790
      %v800 = vld [vmem:[%s708] sm:$0xf]
      %v801 = vld [vmem:[%s708 + $0x4] sm:$0x1]
      %v802 = vld [vmem:[%s708 + $0x8] sm:$0xf]
      %v803 = vld [vmem:[%s708 + $0xc] sm:$0x1]
      %v804 = vld [vmem:[%s708 + $0x10] sm:$0xf]
      %v805 = vld [vmem:[%s708 + $0x14] sm:$0x1]
      %v806 = vld [vmem:[%s708 + $0x18] sm:$0xf]
      %v807 = vld [vmem:[%s708 + $0x1c] sm:$0x1]
      %v808 = vld [vmem:[%s708 + $0x20] sm:$0xf]
      %v809 = vld [vmem:[%s708 + $0x24] sm:$0x1]
      %v810 = vld [vmem:[%s708 + $0x28] sm:$0xf]
      %v811 = vld [vmem:[%s708 + $0x2c] sm:$0x1]
      %v812 = vld [vmem:[%s708 + $0x30] sm:$0xf]
      %v813 = vld [vmem:[%s708 + $0x34] sm:$0x1]
      %v814 = vld [vmem:[%s708 + $0x38] sm:$0xf]
      %v815 = vld [vmem:[%s708 + $0x3c] sm:$0x1]
      %v817 = vshrl.u32 %v800, 16
      %v819 = vrot.slane %v817, 4
      %v820 = vshll.u32 %v800, 16
      %v822 = vrot.slane %v820, 5
      %v823 = vor.u32 %v819, %v822
      %v824 = vrot.slane %v823, 4
      %v826 = vshll.u32 %v801, 16
      %v828 = vrot.slane %v826, 5
      %v829 = vsel %vm317, %v824, %v828
      %v831 = vshrl.u32 %v802, 16
      %v833 = vrot.slane %v831, 4
      %v834 = vshll.u32 %v802, 16
      %v836 = vrot.slane %v834, 5
      %v837 = vor.u32 %v833, %v836
      %v838 = vrot.slane %v837, 4
      %v840 = vshll.u32 %v803, 16
      %v842 = vrot.slane %v840, 5
      %v843 = vsel %vm317, %v838, %v842
      %v845 = vshrl.u32 %v804, 16
      %v847 = vrot.slane %v845, 4
      %v848 = vshll.u32 %v804, 16
      %v850 = vrot.slane %v848, 5
      %v851 = vor.u32 %v847, %v850
      %v852 = vrot.slane %v851, 4
      %v854 = vshll.u32 %v805, 16
      %v856 = vrot.slane %v854, 5
      %v857 = vsel %vm317, %v852, %v856
      %v859 = vshrl.u32 %v806, 16
      %v861 = vrot.slane %v859, 4
      %v862 = vshll.u32 %v806, 16
      %v864 = vrot.slane %v862, 5
      %v865 = vor.u32 %v861, %v864
      %v866 = vrot.slane %v865, 4
      %v868 = vshll.u32 %v807, 16
      %v870 = vrot.slane %v868, 5
      %v871 = vsel %vm317, %v866, %v870
      %v873 = vshrl.u32 %v808, 16
      %v875 = vrot.slane %v873, 4
      %v876 = vshll.u32 %v808, 16
      %v878 = vrot.slane %v876, 5
      %v879 = vor.u32 %v875, %v878
      %v880 = vrot.slane %v879, 4
      %v882 = vshll.u32 %v809, 16
      %v884 = vrot.slane %v882, 5
      %v885 = vsel %vm317, %v880, %v884
      %v887 = vshrl.u32 %v810, 16
      %v889 = vrot.slane %v887, 4
      %v890 = vshll.u32 %v810, 16
      %v892 = vrot.slane %v890, 5
      %v893 = vor.u32 %v889, %v892
      %v894 = vrot.slane %v893, 4
      %v896 = vshll.u32 %v811, 16
      %v898 = vrot.slane %v896, 5
      %v899 = vsel %vm317, %v894, %v898
      %v901 = vshrl.u32 %v812, 16
      %v903 = vrot.slane %v901, 4
      %v904 = vshll.u32 %v812, 16
      %v906 = vrot.slane %v904, 5
      %v907 = vor.u32 %v903, %v906
      %v908 = vrot.slane %v907, 4
      %v910 = vshll.u32 %v813, 16
      %v912 = vrot.slane %v910, 5
      %v913 = vsel %vm317, %v908, %v912
      %v915 = vshrl.u32 %v814, 16
      %v917 = vrot.slane %v915, 4
      %v918 = vshll.u32 %v814, 16
      %v920 = vrot.slane %v918, 5
      %v921 = vor.u32 %v917, %v920
      %v922 = vrot.slane %v921, 4
      %v924 = vshll.u32 %v815, 16
      %v926 = vrot.slane %v924, 5
      %v927 = vsel %vm317, %v922, %v926
      %v928 = vunpack.c.l.b16 %v829
      %v929 = vunpack.c.l.b16 %v843
      %v930 = vunpack.c.l.b16 %v857
      %v931 = vunpack.c.l.b16 %v871
      %v932 = vunpack.c.l.b16 %v885
      %v933 = vunpack.c.l.b16 %v899
      %v934 = vunpack.c.l.b16 %v913
      %v935 = vunpack.c.l.b16 %v927
      %v936 = vpack.c.b16 %v929, %v928
      %v937 = vpack.c.b16 %v931, %v930
      %v938 = vpack.c.b16 %v933, %v932
      %v939 = vpack.c.b16 %v935, %v934
      %940 = vrot.lane.b32.xlu0 %v936, 32
      %v941 = vpop.permute.xlu0 %940
      %942 = vrot.lane.b32.xlu0 %v937, 32
      %v943 = vpop.permute.xlu0 %942
      %944 = vrot.lane.b32.xlu0 %v938, 32
      %v945 = vpop.permute.xlu0 %944
      %946 = vrot.lane.b32.xlu0 %v939, 32
      %v947 = vpop.permute.xlu0 %946
      %vm952 = vcmask 294144
      %953 = vst.msk [vmem:[#allocation2] sm:$0xff] %vm952, %v941
      %954 = vst.msk [vmem:[#allocation2 + $0x8] sm:$0xff] %vm952, %v943
      %955 = vst.msk [vmem:[#allocation2 + $0x10] sm:$0xff] %vm952, %v945
      %956 = vst.msk [vmem:[#allocation2 + $0x18] sm:$0xff] %vm952, %v947
      %v957 = vld [vmem:[#allocation2] sm:$0xff]
      %v958 = vld [vmem:[#allocation2 + $0x8] sm:$0xff]
      %v959 = vld [vmem:[#allocation2 + $0x10] sm:$0xff]
      %v960 = vld [vmem:[#allocation2 + $0x18] sm:$0xff]
      %v961 = vld [vmem:[%s1] sm:$0xf]
      %v962 = vld [vmem:[%s1 + $0x4] sm:$0xf]
      %v963 = vld [vmem:[%s1 + $0x8] sm:$0xf]
      %v964 = vld [vmem:[%s1 + $0xc] sm:$0xf]
      %v965 = vld [vmem:[%s1 + $0x10] sm:$0x3]
      %v971 = vunpack.c.l.b16 %v961
      %v972 = vunpack.c.l.b16 %v962
      %v973 = vunpack.c.l.b16 %v963
      %v974 = vunpack.c.l.b16 %v964
      %v975 = vunpack.c.l.b16 %v965
      %v976 = vpack.c.b16 %v972, %v971
      %v977 = vpack.c.b16 %v974, %v973
      %v978 = vpack.c.b16 %v975, %v975
      %vm981 = vcmask 293888
      %v983 = vsel %vm981, %v957, 0
      %v986 = vsel %vm981, %v958, 0
      %v989 = vsel %vm981, %v959, 0
      %v992 = vsel %vm981, %v960, 0
      %vm994 = vcmask 1041408
      %v996 = vsel %vm994, %v978, 0
      %998 = vmatprep.subr.bf16.mxu0 0
      %999 = vmatpush1.bf16.msra.mxu0 %v976
      %1000 = vmatprep.subr.bf16.mxu0 0
      %1001 = vmatpush1.bf16.msra.mxu0 %v977
      %1002 = vmatprep.subr.bf16.mxu0 0
      %1003 = vmatpush1.bf16.msra.mxu0 %v996
      %1004 = vmatprep.subr.bf16.mxu0 0
      %1005 = vmatpush1.bf16.msra.mxu0 0
      %1006 = vmatprep.subr.bf16.mxu0 0
      %1007 = vmatpush1.bf16.msra.mxu0 0
      %1008 = vmatprep.subr.bf16.mxu0 0
      %1009 = vmatpush1.bf16.msra.mxu0 0
      %1010 = vmatprep.subr.bf16.mxu0 0
      %1011 = vmatpush1.bf16.msra.mxu0 0
      %1012 = vmatprep.subr.bf16.mxu0 0
      %1013 = vmatpush1.bf16.msra.mxu0 0
      %1014 = vmatprep.subr.bf16.mxu0 0
      %1015 = vmatpush1.bf16.msra.mxu0 0
      %1016 = vmatprep.subr.bf16.mxu0 0
      %1017 = vmatpush1.bf16.msra.mxu0 0
      %1018 = vmatprep.subr.bf16.mxu0 0
      %1019 = vmatpush1.bf16.msra.mxu0 0
      %1020 = vmatprep.subr.bf16.mxu0 0
      %1021 = vmatpush1.bf16.msra.mxu0 0
      %1022 = vmatprep.subr.bf16.mxu0 0
      %1023 = vmatpush1.bf16.msra.mxu0 0
      %1024 = vmatprep.subr.bf16.mxu0 0
      %1025 = vmatpush1.bf16.msra.mxu0 0
      %1026 = vmatprep.subr.bf16.mxu0 0
      %1027 = vmatpush1.bf16.msra.mxu0 0
      %1028 = vmatprep.subr.bf16.mxu0 0
      %1029 = vmatpush1.bf16.msra.mxu0 0
      %1030 = vmatprep.mubr.bf16.mxu0 0
      %1031 = vmatmul.mubr.bf16.gmra.mrb[0].mxu0 %v983
      %v1032 = vpop.f32.mrb[0].mxu0
      %v1033 = vadd.f32 0.0, %v1032
      %v1034 = vpop.f32.mrb[0].mxu0
      %v1035 = vpop.f32.mrb[0].mxu0
      %v1036 = vadd.f32 0.0, %v1035
      %v1037 = vpop.f32.mrb[0].mxu0
      %1038 = vmatprep.mubr.bf16.mxu0 0
      %1039 = vmatmul.mubr.bf16.gmra.mrb[0].mxu0 %v986
      %v1040 = vpop.f32.mrb[0].mxu0
      %v1041 = vadd.f32 0.0, %v1040
      %v1042 = vpop.f32.mrb[0].mxu0
      %v1043 = vpop.f32.mrb[0].mxu0
      %v1044 = vadd.f32 0.0, %v1043
      %v1045 = vpop.f32.mrb[0].mxu0
      %1046 = vmatprep.mubr.bf16.mxu0 0
      %1047 = vmatmul.mubr.bf16.gmra.mrb[0].mxu0 %v989
      %v1048 = vpop.f32.mrb[0].mxu0
      %v1049 = vadd.f32 0.0, %v1048
      %v1050 = vpop.f32.mrb[0].mxu0
      %v1051 = vpop.f32.mrb[0].mxu0
      %v1052 = vadd.f32 0.0, %v1051
      %v1053 = vpop.f32.mrb[0].mxu0
      %1054 = vmatprep.mubr.bf16.mxu0 0
      %1055 = vmatmul.mubr.bf16.gmra.mrb[0].mxu0 %v992
      %v1056 = vpop.f32.mrb[0].mxu0
      %v1057 = vadd.f32 0.0, %v1056
      %v1058 = vpop.f32.mrb[0].mxu0
      %v1059 = vpop.f32.mrb[0].mxu0
      %v1060 = vadd.f32 0.0, %v1059
      %v1061 = vpop.f32.mrb[0].mxu0
      %1062 = vdwg.mxu0
      %v1063 = vpack.c.bf16 %v1036, %v1033
      %v1064 = vpack.c.bf16 %v1044, %v1041
      %v1065 = vpack.c.bf16 %v1052, %v1049
      %v1066 = vpack.c.bf16 %v1060, %v1057
      %v1071 = vunpack.c.l.b16 %v1063
      %v1072 = vunpack.c.h.b16 %v1063
      %v1073 = vunpack.c.l.b16 %v1064
      %v1074 = vunpack.c.h.b16 %v1064
      %v1075 = vunpack.c.l.b16 %v1065
      %v1076 = vunpack.c.h.b16 %v1065
      %v1077 = vunpack.c.l.b16 %v1066
      %v1078 = vunpack.c.h.b16 %v1066
      %v1079 = vpack.c.b16 %v1071, %v1071
      %v1080 = vpack.c.b16 %v1072, %v1072
      %v1081 = vpack.c.b16 %v1073, %v1073
      %v1082 = vpack.c.b16 %v1074, %v1074
      %v1083 = vpack.c.b16 %v1075, %v1075
      %v1084 = vpack.c.b16 %v1076, %v1076
      %v1085 = vpack.c.b16 %v1077, %v1077
      %v1086 = vpack.c.b16 %v1078, %v1078
      %vm1095 = vcmask 60416
      %1096 = vst.msk [vmem:[%s208] sm:$0xf] %vm1095, %v1079
      %1097 = vst.msk [vmem:[%s208 + $0x4] sm:$0xf] %vm1095, %v1080
      %1098 = vst.msk [vmem:[%s208 + $0x8] sm:$0xf] %vm1095, %v1081
      %1099 = vst.msk [vmem:[%s208 + $0xc] sm:$0xf] %vm1095, %v1082
      %1100 = vst.msk [vmem:[%s208 + $0x10] sm:$0xf] %vm1095, %v1083
      %1101 = vst.msk [vmem:[%s208 + $0x14] sm:$0xf] %vm1095, %v1084
      %1102 = vst.msk [vmem:[%s208 + $0x18] sm:$0xf] %vm1095, %v1085
      %1103 = vst.msk [vmem:[%s208 + $0x1c] sm:$0xf] %vm1095, %v1086
      %vm1104 = vcmask 64512
      %v1105 = vsel %vm1104, %v1033, 0.0
      %v1106 = vsel %vm1104, %v1036, 0.0
      %v1107 = vadd.f32 %v1105, %v1106
      %v1108 = vsel %vm1104, %v1041, 0.0
      %v1109 = vadd.f32 %v1107, %v1108
      %v1110 = vsel %vm1104, %v1044, 0.0
      %v1111 = vadd.f32 %v1109, %v1110
      %v1112 = vsel %vm1104, %v1049, 0.0
      %v1113 = vadd.f32 %v1111, %v1112
      %v1114 = vsel %vm1104, %v1052, 0.0
      %v1115 = vadd.f32 %v1113, %v1114
      %v1116 = vsel %vm1104, %v1057, 0.0
      %v1117 = vadd.f32 %v1115, %v1116
      %v1118 = vsel %vm1104, %v1060, 0.0
      %v1119 = vadd.f32 %v1117, %v1118
      %v1120 = vrot.slane %v1119, 4
      %v1121 = vadd.f32 %v1119, %v1120
      %v1122 = vrot.slane %v1121, 2
      %v1123 = vadd.f32 %v1121, %v1122
      %v1124 = vrot.slane %v1123, 1
      %v1125 = vadd.f32 %v1123, %v1124
      %vm1126 = vcmask 57344
      %1127 = vst.msk [vmem:[%s211] sm:$0x1] %vm1126, %v1125
      %v1128 = vmul.f32 %v1033, %v1033
      %v1129 = vmul.f32 %v1036, %v1036
      %v1130 = vmul.f32 %v1041, %v1041
      %v1131 = vmul.f32 %v1044, %v1044
      %v1132 = vmul.f32 %v1049, %v1049
      %v1133 = vmul.f32 %v1052, %v1052
      %v1134 = vmul.f32 %v1057, %v1057
      %v1135 = vmul.f32 %v1060, %v1060
      %v1136 = vsel %vm1104, %v1128, 0.0
      %v1137 = vsel %vm1104, %v1129, 0.0
      %v1138 = vadd.f32 %v1136, %v1137
      %v1139 = vsel %vm1104, %v1130, 0.0
      %v1140 = vadd.f32 %v1138, %v1139
      %v1141 = vsel %vm1104, %v1131, 0.0
      %v1142 = vadd.f32 %v1140, %v1141
      %v1143 = vsel %vm1104, %v1132, 0.0
      %v1144 = vadd.f32 %v1142, %v1143
      %v1145 = vsel %vm1104, %v1133, 0.0
      %v1146 = vadd.f32 %v1144, %v1145
      %v1147 = vsel %vm1104, %v1134, 0.0
      %v1148 = vadd.f32 %v1146, %v1147
      %v1149 = vsel %vm1104, %v1135, 0.0
      %v1150 = vadd.f32 %v1148, %v1149
      %v1151 = vrot.slane %v1150, 4
      %v1152 = vadd.f32 %v1150, %v1151
      %v1153 = vrot.slane %v1152, 2
      %v1154 = vadd.f32 %v1152, %v1153
      %v1155 = vrot.slane %v1154, 1
      %v1156 = vadd.f32 %v1154, %v1155
      %1157 = vst.msk [vmem:[%s214] sm:$0x1] %vm1126, %v1156
      %p1158 = scmp.lt.s32.totalorder %s16, 1
      %s1159 = scalar_select %p1158, %s16, 1
      %s1160 = smul.addr %s1159, 8
      %s1161 = smul.addr %s1160, 4
      %s1162 = scalar_lea.vmem %s2, %s1161
      %p1163 = scmp.lt.s32.totalorder %s16, 1
      %s1164 = scalar_select %p1163, %s16, 1
      %s1165 = scalar_lea.vmem %s3, %s1164
      %p1166 = scmp.lt.s32.totalorder %s16, 1
      %s1167 = scalar_select %p1166, %s16, 1
      %s1168 = scalar_lea.vmem %s4, %s1167
      // Predicated region
      $region29: #{a_call__.6} parent=27 // pred_check
        %p1169 = pneg %p81
      $region30: #{a_call__.6} parent=27 // pred_check_branch
        %1171 = sbr.rel (%p1169) target = $region32
      $region31: #{a_call__.6} parent=27 // pred_region
        _
      $region32: #{a_call__.6} parent=27 // pred_fallthru
        _
      // Predicated region
      $region33: #{a_call__.6} parent=27 // pred_check
        %p1172 = pneg %p107
      $region34: #{a_call__.6} parent=27 // pred_check_branch
        %1174 = sbr.rel (%p1172) target = $region36
      $region35: #{a_call__.6} parent=27 // pred_region
        _
      $region36: #{a_call__.6} parent=27 // pred_fallthru
        _
      // Predicated region
      $region37: #{a_call__.6} parent=27 // pred_check
        %p1175 = pneg %p133
      $region38: #{a_call__.6} parent=27 // pred_check_branch
        %1177 = sbr.rel (%p1175) target = $region40
      $region39: #{a_call__.6} parent=27 // pred_region
        _
      $region40: #{a_call__.6} parent=27 // pred_fallthru
        _
    $region28: #{a_call__.6} parent=5 // pred_fallthru
      _
    %p1178 = scmp.le.s32.totalorder 2, %s11
    // Predicated region
    $region41: #{a_call__.6} parent=5 // pred_check
      %p1179 = pneg %p1178
    $region42: #{a_call__.6} parent=5 // pred_check_branch
      %1181 = sbr.rel (%p1179) target = $region44
    $region43: #{a_call__.6} parent=5 // pred_region
      %s1182 = ssub.s32 %s11, 2
      // Predicated region
      $region45: #{a_call__.6} parent=43 // pred_check
        %p1183 = pneg %p87
      $region46: #{a_call__.6} parent=43 // pred_check_branch
        %1185 = sbr.rel (%p1183) target = $region48
      $region47: #{a_call__.6} parent=43 // pred_region
        %p1186 = scmp.lt.s32.totalorder %s17, 1
        %s1187 = scalar_select %p1186, %s17, 1
        %s1188 = smul.addr %s1187, 8
        %s1189 = smul.addr %s1188, 4
        %s1190 = scalar_lea.vmem %s2, %s1189
      $region48: #{a_call__.6} parent=43 // pred_fallthru
        _
      // Predicated region
      $region49: #{a_call__.6} parent=43 // pred_check
        %p1191 = pneg %p113
      $region50: #{a_call__.6} parent=43 // pred_check_branch
        %1193 = sbr.rel (%p1191) target = $region52
      $region51: #{a_call__.6} parent=43 // pred_region
        %p1194 = scmp.lt.s32.totalorder %s17, 1
        %s1195 = scalar_select %p1194, %s17, 1
        %s1196 = scalar_lea.vmem %s3, %s1195
      $region52: #{a_call__.6} parent=43 // pred_fallthru
        _
      // Predicated region
      $region53: #{a_call__.6} parent=43 // pred_check
        %p1197 = pneg %p139
      $region54: #{a_call__.6} parent=43 // pred_check_branch
        %1199 = sbr.rel (%p1197) target = $region56
      $region55: #{a_call__.6} parent=43 // pred_region
        %p1200 = scmp.lt.s32.totalorder %s17, 1
        %s1201 = scalar_select %p1200, %s17, 1
        %s1202 = scalar_lea.vmem %s4, %s1201
      $region56: #{a_call__.6} parent=43 // pred_fallthru
        _
    $region44: #{a_call__.6} parent=5 // pred_fallthru
      _
  $region6: #{a_call__.6} parent=0 // loop_footer
    %s15 = sadd.s32 1, %s11
  $region7: #{a_call__.6} parent=0 // loop_footer_branch
    %10 = sbr.rel target = $region3
  $region8: #{a_call__.6} parent=0 // loop_exit
    _

// kernel: a_call__.5
$region0: #{a_call__.5}
  #allocation0 [shape = 'u32[]', space=smem, size = 0x4, offset = 0x4, fixed_abs, tag = 'smem constant byte address 0x4 - core index']
  #allocation1 [shape = 'u32[144,128]{1,0:T(1,128)}', space=vmem, size = 0x12000, scoped, tag = 'internal scratch']
  #allocation2 [shape = 'bf16[64,72]{1,0:T(16,128)(2,1)}', space=vmem, size = 0x4000, scoped, tag = 'scratch operand']
  %s0 = inlined_call_operand.vmem [shape: bf16[2,1,10,10,8], index: 0, kind: input, shape index: {}]
  %s1 = inlined_call_operand.vmem [shape: bf16[72,8], index: 1, kind: input, shape index: {}]
  %s2 = inlined_call_operand.vmem [shape: f32[1,72], index: 2, kind: input, shape index: {}]
  %s3 = inlined_call_operand.vmem [shape: f32[1,72], index: 3, kind: input, shape index: {}]
  %s4 = inlined_call_operand.vmem [shape: bf16[2,64,8], index: 4, kind: output, shape index: {0}]
  %s5 = inlined_call_operand.vmem [shape: f32[2,1,8], index: 5, kind: output, shape index: {1}]
  %s6 = inlined_call_operand.vmem [shape: f32[2,1,8], index: 6, kind: output, shape index: {2}]
  %7 = xla_tuple %s4, %s5, %s6
  %s8 = sld [smem:[#allocation0]]
  $region65: #{a_call__.5} parent=0
    _
  %s10 = ssub.s32 1, %s8
  %s11 = scalar_select 0, %s10, %s8
  loop: start=0, step=1, limit=4
  $region2: #{a_call__.5} parent=0 // loop_pre_header
    _
  $region3: #{a_call__.5} parent=0 // loop_header
    %s13 = sphi 0, %s17
    %p14 = scmp.ge.s32.totalorder %s13, 4
    %s23 = sphi 0, %s25
    %s26 = sphi 0, %s23
    %s27 = sphi 0, %s26
    %s43 = sphi 0, %s27
    %s47 = sphi 0, %s47
    %s49 = sphi 0, %s47
    %s50 = sphi 0, %s49
    %s64 = sphi 0, %s50
    %s68 = sphi 0, %s68
    %s70 = sphi 0, %s68
    %s71 = sphi 0, %s70
    %s85 = sphi 0, %s71
    %s89 = sphi 0, %s89
    %s91 = sphi 0, %s89
    %s92 = sphi 0, %s91
    %s106 = sphi 0, %s92
    %s112 = sphi 0, %s114
    %s115 = sphi 0, %s112
    %s116 = sphi 0, %s115
    %s132 = sphi 0, %s116
    %s138 = sphi 0, %s140
    %s141 = sphi 0, %s138
    %s142 = sphi 0, %s141
    %s158 = sphi 0, %s142
    %s164 = sphi 0, %s166
    %s167 = sphi 0, %s164
    %s168 = sphi 0, %s167
    %s184 = sphi 0, %s168
  $region4: #{a_call__.5} parent=0 // loop_header_branch
    %16 = sbr.rel (%p14) target = $region8
  $region5: #{a_call__.5} parent=0 // loop_body
    %s18 = ssub.s32 %s13, 1
    %s19 = ssub.s32 %s13, 2
    %s20 = sadd.s32 %s13, 1
    %s21 = ssub.s32 %s13, %s20
    %p22 = scmp.eq.s32.totalorder %s21, 0
    %s24 = sadd.s32 %s23, 1
    %s25 = scalar_select %p22, %s23, %s24
    %p28 = pneg %p22
    %p29 = scmp.eq.s32.totalorder %s13, 1
    %p30 = por %p28, %p29
    %p31 = scmp.ne.s32.totalorder %s23, %s26
    %p32 = scmp.eq.s32.totalorder %s13, 0
    %p33 = por %p31, %p32
    %p34 = scmp.ne.s32.totalorder %s23, %s26
    %p35 = scmp.eq.s32.totalorder %s18, 1
    %p36 = por %p34, %p35
    %p37 = scmp.ne.s32.totalorder %s26, %s27
    %p38 = scmp.eq.s32.totalorder %s18, 0
    %p39 = por %p37, %p38
    %p40 = scmp.ne.s32.totalorder %s26, %s27
    %p41 = scmp.eq.s32.totalorder %s19, 1
    %p42 = por %p40, %p41
    %p44 = scmp.ne.s32.totalorder %s27, %s43
    %p45 = scmp.eq.s32.totalorder %s19, 0
    %p46 = por %p44, %p45
    %s48 = sadd.s32 %s47, 1
    %p51 = scmp.eq.s32.totalorder %s13, 1
    %p52 = scmp.ne.s32.totalorder %s47, %s49
    %p53 = scmp.eq.s32.totalorder %s13, 0
    %p54 = por %p52, %p53
    %p55 = scmp.ne.s32.totalorder %s47, %s49
    %p56 = scmp.eq.s32.totalorder %s18, 1
    %p57 = por %p55, %p56
    %p58 = scmp.ne.s32.totalorder %s49, %s50
    %p59 = scmp.eq.s32.totalorder %s18, 0
    %p60 = por %p58, %p59
    %p61 = scmp.ne.s32.totalorder %s49, %s50
    %p62 = scmp.eq.s32.totalorder %s19, 1
    %p63 = por %p61, %p62
    %p65 = scmp.ne.s32.totalorder %s50, %s64
    %p66 = scmp.eq.s32.totalorder %s19, 0
    %p67 = por %p65, %p66
    %s69 = sadd.s32 %s68, 1
    %p72 = scmp.eq.s32.totalorder %s13, 1
    %p73 = scmp.ne.s32.totalorder %s68, %s70
    %p74 = scmp.eq.s32.totalorder %s13, 0
    %p75 = por %p73, %p74
    %p76 = scmp.ne.s32.totalorder %s68, %s70
    %p77 = scmp.eq.s32.totalorder %s18, 1
    %p78 = por %p76, %p77
    %p79 = scmp.ne.s32.totalorder %s70, %s71
    %p80 = scmp.eq.s32.totalorder %s18, 0
    %p81 = por %p79, %p80
    %p82 = scmp.ne.s32.totalorder %s70, %s71
    %p83 = scmp.eq.s32.totalorder %s19, 1
    %p84 = por %p82, %p83
    %p86 = scmp.ne.s32.totalorder %s71, %s85
    %p87 = scmp.eq.s32.totalorder %s19, 0
    %p88 = por %p86, %p87
    %s90 = sadd.s32 %s89, 1
    %p93 = scmp.eq.s32.totalorder %s13, 1
    %p94 = scmp.ne.s32.totalorder %s89, %s91
    %p95 = scmp.eq.s32.totalorder %s13, 0
    %p96 = por %p94, %p95
    %p97 = scmp.ne.s32.totalorder %s89, %s91
    %p98 = scmp.eq.s32.totalorder %s18, 1
    %p99 = por %p97, %p98
    %p100 = scmp.ne.s32.totalorder %s91, %s92
    %p101 = scmp.eq.s32.totalorder %s18, 0
    %p102 = por %p100, %p101
    %p103 = scmp.ne.s32.totalorder %s91, %s92
    %p104 = scmp.eq.s32.totalorder %s19, 1
    %p105 = por %p103, %p104
    %p107 = scmp.ne.s32.totalorder %s92, %s106
    %p108 = scmp.eq.s32.totalorder %s19, 0
    %p109 = por %p107, %p108
    %s110 = ssub.s32 %s13, %s20
    %p111 = scmp.eq.s32.totalorder %s110, 0
    %s113 = sadd.s32 %s112, 1
    %s114 = scalar_select %p111, %s112, %s113
    %p117 = pneg %p111
    %p118 = scmp.eq.s32.totalorder %s13, 1
    %p119 = por %p117, %p118
    %p120 = scmp.ne.s32.totalorder %s112, %s115
    %p121 = scmp.eq.s32.totalorder %s13, 0
    %p122 = por %p120, %p121
    %p123 = scmp.ne.s32.totalorder %s112, %s115
    %p124 = scmp.eq.s32.totalorder %s18, 1
    %p125 = por %p123, %p124
    %p126 = scmp.ne.s32.totalorder %s115, %s116
    %p127 = scmp.eq.s32.totalorder %s18, 0
    %p128 = por %p126, %p127
    %p129 = scmp.ne.s32.totalorder %s115, %s116
    %p130 = scmp.eq.s32.totalorder %s19, 1
    %p131 = por %p129, %p130
    %p133 = scmp.ne.s32.totalorder %s116, %s132
    %p134 = scmp.eq.s32.totalorder %s19, 0
    %p135 = por %p133, %p134
    %s136 = ssub.s32 %s13, %s20
    %p137 = scmp.eq.s32.totalorder %s136, 0
    %s139 = sadd.s32 %s138, 1
    %s140 = scalar_select %p137, %s138, %s139
    %p143 = pneg %p137
    %p144 = scmp.eq.s32.totalorder %s13, 1
    %p145 = por %p143, %p144
    %p146 = scmp.ne.s32.totalorder %s138, %s141
    %p147 = scmp.eq.s32.totalorder %s13, 0
    %p148 = por %p146, %p147
    %p149 = scmp.ne.s32.totalorder %s138, %s141
    %p150 = scmp.eq.s32.totalorder %s18, 1
    %p151 = por %p149, %p150
    %p152 = scmp.ne.s32.totalorder %s141, %s142
    %p153 = scmp.eq.s32.totalorder %s18, 0
    %p154 = por %p152, %p153
    %p155 = scmp.ne.s32.totalorder %s141, %s142
    %p156 = scmp.eq.s32.totalorder %s19, 1
    %p157 = por %p155, %p156
    %p159 = scmp.ne.s32.totalorder %s142, %s158
    %p160 = scmp.eq.s32.totalorder %s19, 0
    %p161 = por %p159, %p160
    %s162 = ssub.s32 %s13, %s20
    %p163 = scmp.eq.s32.totalorder %s162, 0
    %s165 = sadd.s32 %s164, 1
    %s166 = scalar_select %p163, %s164, %s165
    %p169 = pneg %p163
    %p170 = scmp.eq.s32.totalorder %s13, 1
    %p171 = por %p169, %p170
    %p172 = scmp.ne.s32.totalorder %s164, %s167
    %p173 = scmp.eq.s32.totalorder %s13, 0
    %p174 = por %p172, %p173
    %p175 = scmp.ne.s32.totalorder %s164, %s167
    %p176 = scmp.eq.s32.totalorder %s18, 1
    %p177 = por %p175, %p176
    %p178 = scmp.ne.s32.totalorder %s167, %s168
    %p179 = scmp.eq.s32.totalorder %s18, 0
    %p180 = por %p178, %p179
    %p181 = scmp.ne.s32.totalorder %s167, %s168
    %p182 = scmp.eq.s32.totalorder %s19, 1
    %p183 = por %p181, %p182
    %p185 = scmp.ne.s32.totalorder %s168, %s184
    %p186 = scmp.eq.s32.totalorder %s19, 0
    %p187 = por %p185, %p186
    %p188 = scmp.le.s32.totalorder 1, %s13
    %p189 = scmp.lt.s32.totalorder %s13, 3
    %p190 = pnand %p188, %p189
    %p191 = pneg %p190
    // Predicated region
    $region9: #{a_call__.5} parent=5 // pred_check
      _
    $region10: #{a_call__.5} parent=5 // pred_check_branch
      %193 = sbr.rel (%p190) target = $region12
    $region11: #{a_call__.5} parent=5 // pred_region
      %s194 = ssub.s32 %s13, 1
      // Predicated region
      $region13: #{a_call__.5} parent=11 // pred_check
        %p195 = pneg %p60
      $region14: #{a_call__.5} parent=11 // pred_check_branch
        %197 = sbr.rel (%p195) target = $region16
      $region15: #{a_call__.5} parent=11 // pred_region
        _
      $region16: #{a_call__.5} parent=11 // pred_fallthru
        _
      // Predicated region
      $region17: #{a_call__.5} parent=11 // pred_check
        %p198 = pneg %p81
      $region18: #{a_call__.5} parent=11 // pred_check_branch
        %200 = sbr.rel (%p198) target = $region20
      $region19: #{a_call__.5} parent=11 // pred_region
        _
      $region20: #{a_call__.5} parent=11 // pred_fallthru
        _
      // Predicated region
      $region21: #{a_call__.5} parent=11 // pred_check
        %p201 = pneg %p102
      $region22: #{a_call__.5} parent=11 // pred_check_branch
        %203 = sbr.rel (%p201) target = $region24
      $region23: #{a_call__.5} parent=11 // pred_region
        _
      $region24: #{a_call__.5} parent=11 // pred_fallthru
        _
    $region12: #{a_call__.5} parent=5 // pred_fallthru
      _
    %p204 = scmp.lt.s32.totalorder %s13, 2
    // Predicated region
    $region25: #{a_call__.5} parent=5 // pred_check
      %p205 = pneg %p204
    $region26: #{a_call__.5} parent=5 // pred_check_branch
      %207 = sbr.rel (%p205) target = $region28
    $region27: #{a_call__.5} parent=5 // pred_region
      // Predicated region
      $region29: #{a_call__.5} parent=27 // pred_check
        %p208 = pneg %p33
      $region30: #{a_call__.5} parent=27 // pred_check_branch
        %210 = sbr.rel (%p208) target = $region32
      $region31: #{a_call__.5} parent=27 // pred_region
        %p211 = scmp.lt.s32.totalorder %s13, 1
        %s212 = scalar_select %p211, %s13, 1
        %s213 = smul.addr %s212, 20
        %s214 = smul.addr %s213, 4
        %s215 = scalar_lea.vmem %s0, %s214
      $region32: #{a_call__.5} parent=27 // pred_fallthru
        _
    $region28: #{a_call__.5} parent=5 // pred_fallthru
      _
    %p216 = scmp.le.s32.totalorder 1, %s13
    %p217 = scmp.lt.s32.totalorder %s13, 3
    %p218 = pnand %p216, %p217
    %p219 = pneg %p218
    // Predicated region
    $region33: #{a_call__.5} parent=5 // pred_check
      _
    $region34: #{a_call__.5} parent=5 // pred_check_branch
      %221 = sbr.rel (%p218) target = $region36
    $region35: #{a_call__.5} parent=5 // pred_region
      %s222 = ssub.s32 %s13, 1
      %p223 = scmp.lt.s32.totalorder %s18, 1
      %s224 = scalar_select %p223, %s18, 1
      %s225 = smul.addr %s224, 20
      %s226 = smul.addr %s225, 4
      %s227 = scalar_lea.vmem %s0, %s226
      %p228 = pneg %p39
      %p229 = pneg %p36
      %p230 = pneg %p60
      %p231 = pneg %p57
      %p232 = pneg %p81
      %p233 = pneg %p78
      %p234 = pneg %p102
      %p235 = pneg %p99
      %p236 = pneg %p128
      %p237 = pneg %p125
      %p238 = scmp.lt.s32.totalorder %s18, 1
      %s239 = scalar_select %p238, %s18, 1
      %s240 = smul.addr %s239, 8
      %s241 = smul.addr %s240, 4
      %s242 = scalar_lea.vmem %s4, %s241
      %p243 = pneg %p154
      %p244 = pneg %p151
      %p245 = scmp.lt.s32.totalorder %s18, 1
      %s246 = scalar_select %p245, %s18, 1
      %s247 = scalar_lea.vmem %s5, %s246
      %p248 = pneg %p180
      %p249 = pneg %p177
      %p250 = scmp.lt.s32.totalorder %s18, 1
      %s251 = scalar_select %p250, %s18, 1
      %s252 = scalar_lea.vmem %s6, %s251
      %p253 = scmp.lt.s32.totalorder %s18, 1
      %s254 = scalar_select %p253, %s18, 1
      %s255 = smul.addr %s254, 20
      %s256 = smul.addr %s255, 4
      %s257 = scalar_lea.vmem %s0, %s256
      %p258 = scmp.lt.s32.totalorder %s18, 1
      %s259 = scalar_select %p258, %s18, 1
      %s260 = smul.addr %s259, 8
      %s261 = smul.addr %s260, 4
      %s262 = scalar_lea.vmem %s4, %s261
      %p263 = scmp.lt.s32.totalorder %s18, 1
      %s264 = scalar_select %p263, %s18, 1
      %s265 = scalar_lea.vmem %s5, %s264
      %p266 = scmp.lt.s32.totalorder %s18, 1
      %s267 = scalar_select %p266, %s18, 1
      %s268 = scalar_lea.vmem %s6, %s267
      %v270 = vld [vmem:[%s257] sm:$0xf]
      %v271 = vld [vmem:[%s257 + $0x8] sm:$0xf]
      %v272 = vld [vmem:[%s257 + $0x10] sm:$0xf]
      %v273 = vld [vmem:[%s257 + $0x18] sm:$0xf]
      %v274 = vld [vmem:[%s257 + $0x20] sm:$0xf]
      %v275 = vld [vmem:[%s257 + $0x28] sm:$0xf]
      %v276 = vld [vmem:[%s257 + $0x30] sm:$0xf]
      %v277 = vld [vmem:[%s257 + $0x38] sm:$0xf]
      %v286 = vunpack.c.l.b16 %v270
      %v287 = vunpack.c.l.b16 %v271
      %v288 = vunpack.c.l.b16 %v272
      %v289 = vunpack.c.l.b16 %v273
      %v290 = vunpack.c.l.b16 %v274
      %v291 = vunpack.c.l.b16 %v275
      %v292 = vunpack.c.l.b16 %v276
      %v293 = vunpack.c.l.b16 %v277
      %v294 = vpack.c.b16 %v287, %v286
      %v295 = vpack.c.b16 %v289, %v288
      %v296 = vpack.c.b16 %v291, %v290
      %v297 = vpack.c.b16 %v293, %v292
      %vm302 = vcmask 64512
      %303 = vst.msk [vmem:[#allocation2] sm:$0xff] %vm302, %v294
      %304 = vst.msk [vmem:[#allocation2 + $0x8] sm:$0xff] %vm302, %v295
      %305 = vst.msk [vmem:[#allocation2 + $0x10] sm:$0xff] %vm302, %v296
      %306 = vst.msk [vmem:[#allocation2 + $0x18] sm:$0xff] %vm302, %v297
      %v307 = vld [vmem:[%s257] sm:$0xf]
      %v308 = vld [vmem:[%s257 + $0x4] sm:$0x1]
      %v309 = vld [vmem:[%s257 + $0x8] sm:$0xf]
      %v310 = vld [vmem:[%s257 + $0xc] sm:$0x1]
      %v311 = vld [vmem:[%s257 + $0x10] sm:$0xf]
      %v312 = vld [vmem:[%s257 + $0x14] sm:$0x1]
      %v313 = vld [vmem:[%s257 + $0x18] sm:$0xf]
      %v314 = vld [vmem:[%s257 + $0x1c] sm:$0x1]
      %v315 = vld [vmem:[%s257 + $0x20] sm:$0xf]
      %v316 = vld [vmem:[%s257 + $0x24] sm:$0x1]
      %v317 = vld [vmem:[%s257 + $0x28] sm:$0xf]
      %v318 = vld [vmem:[%s257 + $0x2c] sm:$0x1]
      %v319 = vld [vmem:[%s257 + $0x30] sm:$0xf]
      %v320 = vld [vmem:[%s257 + $0x34] sm:$0x1]
      %v321 = vld [vmem:[%s257 + $0x38] sm:$0xf]
      %v322 = vld [vmem:[%s257 + $0x3c] sm:$0x1]
      %vm323 = vsmask.f32 3328
      %vm324 = vsmask.f32 7440
      %vm325 = vmor %vm323, %vm324
      %v327 = vshrl.u32 %v307, 16
      %v329 = vrot.slane %v327, 4
      %v330 = vshll.u32 %v307, 16
      %v332 = vrot.slane %v330, 5
      %v333 = vor.u32 %v329, %v332
      %v334 = vrot.slane %v333, 4
      %v336 = vshll.u32 %v308, 16
      %v338 = vrot.slane %v336, 5
      %v339 = vsel %vm325, %v334, %v338
      %v341 = vshrl.u32 %v309, 16
      %v343 = vrot.slane %v341, 4
      %v344 = vshll.u32 %v309, 16
      %v346 = vrot.slane %v344, 5
      %v347 = vor.u32 %v343, %v346
      %v348 = vrot.slane %v347, 4
      %v350 = vshll.u32 %v310, 16
      %v352 = vrot.slane %v350, 5
      %v353 = vsel %vm325, %v348, %v352
      %v355 = vshrl.u32 %v311, 16
      %v357 = vrot.slane %v355, 4
      %v358 = vshll.u32 %v311, 16
      %v360 = vrot.slane %v358, 5
      %v361 = vor.u32 %v357, %v360
      %v362 = vrot.slane %v361, 4
      %v364 = vshll.u32 %v312, 16
      %v366 = vrot.slane %v364, 5
      %v367 = vsel %vm325, %v362, %v366
      %v369 = vshrl.u32 %v313, 16
      %v371 = vrot.slane %v369, 4
      %v372 = vshll.u32 %v313, 16
      %v374 = vrot.slane %v372, 5
      %v375 = vor.u32 %v371, %v374
      %v376 = vrot.slane %v375, 4
      %v378 = vshll.u32 %v314, 16
      %v380 = vrot.slane %v378, 5
      %v381 = vsel %vm325, %v376, %v380
      %v383 = vshrl.u32 %v315, 16
      %v385 = vrot.slane %v383, 4
      %v386 = vshll.u32 %v315, 16
      %v388 = vrot.slane %v386, 5
      %v389 = vor.u32 %v385, %v388
      %v390 = vrot.slane %v389, 4
      %v392 = vshll.u32 %v316, 16
      %v394 = vrot.slane %v392, 5
      %v395 = vsel %vm325, %v390, %v394
      %v397 = vshrl.u32 %v317, 16
      %v399 = vrot.slane %v397, 4
      %v400 = vshll.u32 %v317, 16
      %v402 = vrot.slane %v400, 5
      %v403 = vor.u32 %v399, %v402
      %v404 = vrot.slane %v403, 4
      %v406 = vshll.u32 %v318, 16
      %v408 = vrot.slane %v406, 5
      %v409 = vsel %vm325, %v404, %v408
      %v411 = vshrl.u32 %v319, 16
      %v413 = vrot.slane %v411, 4
      %v414 = vshll.u32 %v319, 16
      %v416 = vrot.slane %v414, 5
      %v417 = vor.u32 %v413, %v416
      %v418 = vrot.slane %v417, 4
      %v420 = vshll.u32 %v320, 16
      %v422 = vrot.slane %v420, 5
      %v423 = vsel %vm325, %v418, %v422
      %v425 = vshrl.u32 %v321, 16
      %v427 = vrot.slane %v425, 4
      %v428 = vshll.u32 %v321, 16
      %v430 = vrot.slane %v428, 5
      %v431 = vor.u32 %v427, %v430
      %v432 = vrot.slane %v431, 4
      %v434 = vshll.u32 %v322, 16
      %v436 = vrot.slane %v434, 5
      %v437 = vsel %vm325, %v432, %v436
      %v438 = vunpack.c.l.b16 %v339
      %v439 = vunpack.c.l.b16 %v353
      %v440 = vunpack.c.l.b16 %v367
      %v441 = vunpack.c.l.b16 %v381
      %v442 = vunpack.c.l.b16 %v395
      %v443 = vunpack.c.l.b16 %v409
      %v444 = vunpack.c.l.b16 %v423
      %v445 = vunpack.c.l.b16 %v437
      %v446 = vpack.c.b16 %v439, %v438
      %v447 = vpack.c.b16 %v441, %v440
      %v448 = vpack.c.b16 %v443, %v442
      %v449 = vpack.c.b16 %v445, %v444
      %450 = vrot.lane.b32.xlu0 %v446, 8
      %v451 = vpop.permute.xlu0 %450
      %452 = vrot.lane.b32.xlu0 %v447, 8
      %v453 = vpop.permute.xlu0 %452
      %454 = vrot.lane.b32.xlu0 %v448, 8
      %v455 = vpop.permute.xlu0 %454
      %456 = vrot.lane.b32.xlu0 %v449, 8
      %v457 = vpop.permute.xlu0 %456
      %vm462 = vcmask 130112
      %463 = vst.msk [vmem:[#allocation2] sm:$0xff] %vm462, %v451
      %464 = vst.msk [vmem:[#allocation2 + $0x8] sm:$0xff] %vm462, %v453
      %465 = vst.msk [vmem:[#allocation2 + $0x10] sm:$0xff] %vm462, %v455
      %466 = vst.msk [vmem:[#allocation2 + $0x18] sm:$0xff] %vm462, %v457
      %v467 = vld [vmem:[%s257] sm:$0xe]
      %v468 = vld [vmem:[%s257 + $0x4] sm:$0x1]
      %v469 = vld [vmem:[%s257 + $0x8] sm:$0xe]
      %v470 = vld [vmem:[%s257 + $0xc] sm:$0x1]
      %v471 = vld [vmem:[%s257 + $0x10] sm:$0xe]
      %v472 = vld [vmem:[%s257 + $0x14] sm:$0x1]
      %v473 = vld [vmem:[%s257 + $0x18] sm:$0xe]
      %v474 = vld [vmem:[%s257 + $0x1c] sm:$0x1]
      %v475 = vld [vmem:[%s257 + $0x20] sm:$0xe]
      %v476 = vld [vmem:[%s257 + $0x24] sm:$0x1]
      %v477 = vld [vmem:[%s257 + $0x28] sm:$0xe]
      %v478 = vld [vmem:[%s257 + $0x2c] sm:$0x1]
      %v479 = vld [vmem:[%s257 + $0x30] sm:$0xe]
      %v480 = vld [vmem:[%s257 + $0x34] sm:$0x1]
      %v481 = vld [vmem:[%s257 + $0x38] sm:$0xe]
      %v482 = vld [vmem:[%s257 + $0x3c] sm:$0x1]
      %vm499 = vcmask 1042432
      %vm500 = vcmask 1046532
      %vm501 = vmor %vm499, %vm500
      %v502 = vrot.slane %v467, 5
      %v503 = vrot.slane %v502, 4
      %v504 = vrot.slane %v468, 5
      %v505 = vsel %vm501, %v503, %v504
      %v506 = vrot.slane %v469, 5
      %v507 = vrot.slane %v506, 4
      %v508 = vrot.slane %v470, 5
      %v509 = vsel %vm501, %v507, %v508
      %v510 = vrot.slane %v471, 5
      %v511 = vrot.slane %v510, 4
      %v512 = vrot.slane %v472, 5
      %v513 = vsel %vm501, %v511, %v512
      %v514 = vrot.slane %v473, 5
      %v515 = vrot.slane %v514, 4
      %v516 = vrot.slane %v474, 5
      %v517 = vsel %vm501, %v515, %v516
      %v518 = vrot.slane %v475, 5
      %v519 = vrot.slane %v518, 4
      %v520 = vrot.slane %v476, 5
      %v521 = vsel %vm501, %v519, %v520
      %v522 = vrot.slane %v477, 5
      %v523 = vrot.slane %v522, 4
      %v524 = vrot.slane %v478, 5
      %v525 = vsel %vm501, %v523, %v524
      %v526 = vrot.slane %v479, 5
      %v527 = vrot.slane %v526, 4
      %v528 = vrot.slane %v480, 5
      %v529 = vsel %vm501, %v527, %v528
      %v530 = vrot.slane %v481, 5
      %v531 = vrot.slane %v530, 4
      %v532 = vrot.slane %v482, 5
      %v533 = vsel %vm501, %v531, %v532
      %v534 = vunpack.c.l.b16 %v505
      %v535 = vunpack.c.l.b16 %v509
      %v536 = vunpack.c.l.b16 %v513
      %v537 = vunpack.c.l.b16 %v517
      %v538 = vunpack.c.l.b16 %v521
      %v539 = vunpack.c.l.b16 %v525
      %v540 = vunpack.c.l.b16 %v529
      %v541 = vunpack.c.l.b16 %v533
      %v542 = vpack.c.b16 %v535, %v534
      %v543 = vpack.c.b16 %v537, %v536
      %v544 = vpack.c.b16 %v539, %v538
      %v545 = vpack.c.b16 %v541, %v540
      %546 = vrot.lane.b32.xlu0 %v542, 16
      %v547 = vpop.permute.xlu0 %546
      %548 = vrot.lane.b32.xlu0 %v543, 16
      %v549 = vpop.permute.xlu0 %548
      %550 = vrot.lane.b32.xlu0 %v544, 16
      %v551 = vpop.permute.xlu0 %550
      %552 = vrot.lane.b32.xlu0 %v545, 16
      %v553 = vpop.permute.xlu0 %552
      %vm558 = vcmask 195712
      %559 = vst.msk [vmem:[#allocation2] sm:$0xff] %vm558, %v547
      %560 = vst.msk [vmem:[#allocation2 + $0x8] sm:$0xff] %vm558, %v549
      %561 = vst.msk [vmem:[#allocation2 + $0x10] sm:$0xff] %vm558, %v551
      %562 = vst.msk [vmem:[#allocation2 + $0x18] sm:$0xff] %vm558, %v553
      %s563 = scalar_lea.vmem %s257, 8
      %v564 = vld [vmem:[%s563] sm:$0xf]
      %v565 = vld [vmem:[%s563 + $0x8] sm:$0xf]
      %v566 = vld [vmem:[%s563 + $0x10] sm:$0xf]
      %v567 = vld [vmem:[%s563 + $0x18] sm:$0xf]
      %v568 = vld [vmem:[%s563 + $0x20] sm:$0xf]
      %v569 = vld [vmem:[%s563 + $0x28] sm:$0xf]
      %v570 = vld [vmem:[%s563 + $0x30] sm:$0xf]
      %v571 = vld [vmem:[%s563 + $0x38] sm:$0xf]
      %v580 = vunpack.c.l.b16 %v564
      %v581 = vunpack.c.l.b16 %v565
      %v582 = vunpack.c.l.b16 %v566
      %v583 = vunpack.c.l.b16 %v567
      %v584 = vunpack.c.l.b16 %v568
      %v585 = vunpack.c.l.b16 %v569
      %v586 = vunpack.c.l.b16 %v570
      %v587 = vunpack.c.l.b16 %v571
      %v588 = vpack.c.b16 %v581, %v580
      %v589 = vpack.c.b16 %v583, %v582
      %v590 = vpack.c.b16 %v585, %v584
      %v591 = vpack.c.b16 %v587, %v586
      %592 = vrot.lane.b32.xlu0 %v588, 24
      %v593 = vpop.permute.xlu0 %592
      %594 = vrot.lane.b32.xlu0 %v589, 24
      %v595 = vpop.permute.xlu0 %594
      %596 = vrot.lane.b32.xlu0 %v590, 24
      %v597 = vpop.permute.xlu0 %596
      %598 = vrot.lane.b32.xlu0 %v591, 24
      %v599 = vpop.permute.xlu0 %598
      %vm604 = vcmask 261312
      %605 = vst.msk [vmem:[#allocation2] sm:$0xff] %vm604, %v593
      %606 = vst.msk [vmem:[#allocation2 + $0x8] sm:$0xff] %vm604, %v595
      %607 = vst.msk [vmem:[#allocation2 + $0x10] sm:$0xff] %vm604, %v597
      %608 = vst.msk [vmem:[#allocation2 + $0x18] sm:$0xff] %vm604, %v599
      %v609 = vld [vmem:[%s563] sm:$0xf]
      %v610 = vld [vmem:[%s563 + $0x4] sm:$0x1]
      %v611 = vld [vmem:[%s563 + $0x8] sm:$0xf]
      %v612 = vld [vmem:[%s563 + $0xc] sm:$0x1]
      %v613 = vld [vmem:[%s563 + $0x10] sm:$0xf]
      %v614 = vld [vmem:[%s563 + $0x14] sm:$0x1]
      %v615 = vld [vmem:[%s563 + $0x18] sm:$0xf]
      %v616 = vld [vmem:[%s563 + $0x1c] sm:$0x1]
      %v617 = vld [vmem:[%s563 + $0x20] sm:$0xf]
      %v618 = vld [vmem:[%s563 + $0x24] sm:$0x1]
      %v619 = vld [vmem:[%s563 + $0x28] sm:$0xf]
      %v620 = vld [vmem:[%s563 + $0x2c] sm:$0x1]
      %v621 = vld [vmem:[%s563 + $0x30] sm:$0xf]
      %v622 = vld [vmem:[%s563 + $0x34] sm:$0x1]
      %v623 = vld [vmem:[%s563 + $0x38] sm:$0xf]
      %v624 = vld [vmem:[%s563 + $0x3c] sm:$0x1]
      %v626 = vshrl.u32 %v609, 16
      %v628 = vrot.slane %v626, 4
      %v629 = vshll.u32 %v609, 16
      %v631 = vrot.slane %v629, 5
      %v632 = vor.u32 %v628, %v631
      %v633 = vrot.slane %v632, 4
      %v635 = vshll.u32 %v610, 16
      %v637 = vrot.slane %v635, 5
      %v638 = vsel %vm325, %v633, %v637
      %v640 = vshrl.u32 %v611, 16
      %v642 = vrot.slane %v640, 4
      %v643 = vshll.u32 %v611, 16
      %v645 = vrot.slane %v643, 5
      %v646 = vor.u32 %v642, %v645
      %v647 = vrot.slane %v646, 4
      %v649 = vshll.u32 %v612, 16
      %v651 = vrot.slane %v649, 5
      %v652 = vsel %vm325, %v647, %v651
      %v654 = vshrl.u32 %v613, 16
      %v656 = vrot.slane %v654, 4
      %v657 = vshll.u32 %v613, 16
      %v659 = vrot.slane %v657, 5
      %v660 = vor.u32 %v656, %v659
      %v661 = vrot.slane %v660, 4
      %v663 = vshll.u32 %v614, 16
      %v665 = vrot.slane %v663, 5
      %v666 = vsel %vm325, %v661, %v665
      %v668 = vshrl.u32 %v615, 16
      %v670 = vrot.slane %v668, 4
      %v671 = vshll.u32 %v615, 16
      %v673 = vrot.slane %v671, 5
      %v674 = vor.u32 %v670, %v673
      %v675 = vrot.slane %v674, 4
      %v677 = vshll.u32 %v616, 16
      %v679 = vrot.slane %v677, 5
      %v680 = vsel %vm325, %v675, %v679
      %v682 = vshrl.u32 %v617, 16
      %v684 = vrot.slane %v682, 4
      %v685 = vshll.u32 %v617, 16
      %v687 = vrot.slane %v685, 5
      %v688 = vor.u32 %v684, %v687
      %v689 = vrot.slane %v688, 4
      %v691 = vshll.u32 %v618, 16
      %v693 = vrot.slane %v691, 5
      %v694 = vsel %vm325, %v689, %v693
      %v696 = vshrl.u32 %v619, 16
      %v698 = vrot.slane %v696, 4
      %v699 = vshll.u32 %v619, 16
      %v701 = vrot.slane %v699, 5
      %v702 = vor.u32 %v698, %v701
      %v703 = vrot.slane %v702, 4
      %v705 = vshll.u32 %v620, 16
      %v707 = vrot.slane %v705, 5
      %v708 = vsel %vm325, %v703, %v707
      %v710 = vshrl.u32 %v621, 16
      %v712 = vrot.slane %v710, 4
      %v713 = vshll.u32 %v621, 16
      %v715 = vrot.slane %v713, 5
      %v716 = vor.u32 %v712, %v715
      %v717 = vrot.slane %v716, 4
      %v719 = vshll.u32 %v622, 16
      %v721 = vrot.slane %v719, 5
      %v722 = vsel %vm325, %v717, %v721
      %v724 = vshrl.u32 %v623, 16
      %v726 = vrot.slane %v724, 4
      %v727 = vshll.u32 %v623, 16
      %v729 = vrot.slane %v727, 5
      %v730 = vor.u32 %v726, %v729
      %v731 = vrot.slane %v730, 4
      %v733 = vshll.u32 %v624, 16
      %v735 = vrot.slane %v733, 5
      %v736 = vsel %vm325, %v731, %v735
      %v737 = vunpack.c.l.b16 %v638
      %v738 = vunpack.c.l.b16 %v652
      %v739 = vunpack.c.l.b16 %v666
      %v740 = vunpack.c.l.b16 %v680
      %v741 = vunpack.c.l.b16 %v694
      %v742 = vunpack.c.l.b16 %v708
      %v743 = vunpack.c.l.b16 %v722
      %v744 = vunpack.c.l.b16 %v736
      %v745 = vpack.c.b16 %v738, %v737
      %v746 = vpack.c.b16 %v740, %v739
      %v747 = vpack.c.b16 %v742, %v741
      %v748 = vpack.c.b16 %v744, %v743
      %749 = vrot.lane.b32.xlu0 %v745, 32
      %v750 = vpop.permute.xlu0 %749
      %751 = vrot.lane.b32.xlu0 %v746, 32
      %v752 = vpop.permute.xlu0 %751
      %753 = vrot.lane.b32.xlu0 %v747, 32
      %v754 = vpop.permute.xlu0 %753
      %755 = vrot.lane.b32.xlu0 %v748, 32
      %v756 = vpop.permute.xlu0 %755
      %vm761 = vcmask 326912
      %762 = vst.msk [vmem:[#allocation2] sm:$0xff] %vm761, %v750
      %763 = vst.msk [vmem:[#allocation2 + $0x8] sm:$0xff] %vm761, %v752
      %764 = vst.msk [vmem:[#allocation2 + $0x10] sm:$0xff] %vm761, %v754
      %765 = vst.msk [vmem:[#allocation2 + $0x18] sm:$0xff] %vm761, %v756
      %v766 = vld [vmem:[%s563] sm:$0xe]
      %v767 = vld [vmem:[%s563 + $0x4] sm:$0x1]
      %v768 = vld [vmem:[%s563 + $0x8] sm:$0xe]
      %v769 = vld [vmem:[%s563 + $0xc] sm:$0x1]
      %v770 = vld [vmem:[%s563 + $0x10] sm:$0xe]
      %v771 = vld [vmem:[%s563 + $0x14] sm:$0x1]
      %v772 = vld [vmem:[%s563 + $0x18] sm:$0xe]
      %v773 = vld [vmem:[%s563 + $0x1c] sm:$0x1]
      %v774 = vld [vmem:[%s563 + $0x20] sm:$0xe]
      %v775 = vld [vmem:[%s563 + $0x24] sm:$0x1]
      %v776 = vld [vmem:[%s563 + $0x28] sm:$0xe]
      %v777 = vld [vmem:[%s563 + $0x2c] sm:$0x1]
      %v778 = vld [vmem:[%s563 + $0x30] sm:$0xe]
      %v779 = vld [vmem:[%s563 + $0x34] sm:$0x1]
      %v780 = vld [vmem:[%s563 + $0x38] sm:$0xe]
      %v781 = vld [vmem:[%s563 + $0x3c] sm:$0x1]
      %v798 = vrot.slane %v766, 5
      %v799 = vrot.slane %v798, 4
      %v800 = vrot.slane %v767, 5
      %v801 = vsel %vm501, %v799, %v800
      %v802 = vrot.slane %v768, 5
      %v803 = vrot.slane %v802, 4
      %v804 = vrot.slane %v769, 5
      %v805 = vsel %vm501, %v803, %v804
      %v806 = vrot.slane %v770, 5
      %v807 = vrot.slane %v806, 4
      %v808 = vrot.slane %v771, 5
      %v809 = vsel %vm501, %v807, %v808
      %v810 = vrot.slane %v772, 5
      %v811 = vrot.slane %v810, 4
      %v812 = vrot.slane %v773, 5
      %v813 = vsel %vm501, %v811, %v812
      %v814 = vrot.slane %v774, 5
      %v815 = vrot.slane %v814, 4
      %v816 = vrot.slane %v775, 5
      %v817 = vsel %vm501, %v815, %v816
      %v818 = vrot.slane %v776, 5
      %v819 = vrot.slane %v818, 4
      %v820 = vrot.slane %v777, 5
      %v821 = vsel %vm501, %v819, %v820
      %v822 = vrot.slane %v778, 5
      %v823 = vrot.slane %v822, 4
      %v824 = vrot.slane %v779, 5
      %v825 = vsel %vm501, %v823, %v824
      %v826 = vrot.slane %v780, 5
      %v827 = vrot.slane %v826, 4
      %v828 = vrot.slane %v781, 5
      %v829 = vsel %vm501, %v827, %v828
      %v830 = vunpack.c.l.b16 %v801
      %v831 = vunpack.c.l.b16 %v805
      %v832 = vunpack.c.l.b16 %v809
      %v833 = vunpack.c.l.b16 %v813
      %v834 = vunpack.c.l.b16 %v817
      %v835 = vunpack.c.l.b16 %v821
      %v836 = vunpack.c.l.b16 %v825
      %v837 = vunpack.c.l.b16 %v829
      %v838 = vpack.c.b16 %v831, %v830
      %v839 = vpack.c.b16 %v833, %v832
      %v840 = vpack.c.b16 %v835, %v834
      %v841 = vpack.c.b16 %v837, %v836
      %842 = vrot.lane.b32.xlu0 %v838, 40
      %v843 = vpop.permute.xlu0 %842
      %844 = vrot.lane.b32.xlu0 %v839, 40
      %v845 = vpop.permute.xlu0 %844
      %846 = vrot.lane.b32.xlu0 %v840, 40
      %v847 = vpop.permute.xlu0 %846
      %848 = vrot.lane.b32.xlu0 %v841, 40
      %v849 = vpop.permute.xlu0 %848
      %vm854 = vcmask 392512
      %855 = vst.msk [vmem:[#allocation2] sm:$0xff] %vm854, %v843
      %856 = vst.msk [vmem:[#allocation2 + $0x8] sm:$0xff] %vm854, %v845
      %857 = vst.msk [vmem:[#allocation2 + $0x10] sm:$0xff] %vm854, %v847
      %858 = vst.msk [vmem:[#allocation2 + $0x18] sm:$0xff] %vm854, %v849
      %s859 = scalar_lea.vmem %s257, 16
      %v860 = vld [vmem:[%s859] sm:$0xf]
      %v861 = vld [vmem:[%s859 + $0x8] sm:$0xf]
      %v862 = vld [vmem:[%s859 + $0x10] sm:$0xf]
      %v863 = vld [vmem:[%s859 + $0x18] sm:$0xf]
      %v864 = vld [vmem:[%s859 + $0x20] sm:$0xf]
      %v865 = vld [vmem:[%s859 + $0x28] sm:$0xf]
      %v866 = vld [vmem:[%s859 + $0x30] sm:$0xf]
      %v867 = vld [vmem:[%s859 + $0x38] sm:$0xf]
      %v876 = vunpack.c.l.b16 %v860
      %v877 = vunpack.c.l.b16 %v861
      %v878 = vunpack.c.l.b16 %v862
      %v879 = vunpack.c.l.b16 %v863
      %v880 = vunpack.c.l.b16 %v864
      %v881 = vunpack.c.l.b16 %v865
      %v882 = vunpack.c.l.b16 %v866
      %v883 = vunpack.c.l.b16 %v867
      %v884 = vpack.c.b16 %v877, %v876
      %v885 = vpack.c.b16 %v879, %v878
      %v886 = vpack.c.b16 %v881, %v880
      %v887 = vpack.c.b16 %v883, %v882
      %888 = vrot.lane.b32.xlu0 %v884, 48
      %v889 = vpop.permute.xlu0 %888
      %890 = vrot.lane.b32.xlu0 %v885, 48
      %v891 = vpop.permute.xlu0 %890
      %892 = vrot.lane.b32.xlu0 %v886, 48
      %v893 = vpop.permute.xlu0 %892
      %894 = vrot.lane.b32.xlu0 %v887, 48
      %v895 = vpop.permute.xlu0 %894
      %vm900 = vcmask 458112
      %901 = vst.msk [vmem:[#allocation2] sm:$0xff] %vm900, %v889
      %902 = vst.msk [vmem:[#allocation2 + $0x8] sm:$0xff] %vm900, %v891
      %903 = vst.msk [vmem:[#allocation2 + $0x10] sm:$0xff] %vm900, %v893
      %904 = vst.msk [vmem:[#allocation2 + $0x18] sm:$0xff] %vm900, %v895
      %v905 = vld [vmem:[%s859] sm:$0xf]
      %v906 = vld [vmem:[%s859 + $0x4] sm:$0x1]
      %v907 = vld [vmem:[%s859 + $0x8] sm:$0xf]
      %v908 = vld [vmem:[%s859 + $0xc] sm:$0x1]
      %v909 = vld [vmem:[%s859 + $0x10] sm:$0xf]
      %v910 = vld [vmem:[%s859 + $0x14] sm:$0x1]
      %v911 = vld [vmem:[%s859 + $0x18] sm:$0xf]
      %v912 = vld [vmem:[%s859 + $0x1c] sm:$0x1]
      %v913 = vld [vmem:[%s859 + $0x20] sm:$0xf]
      %v914 = vld [vmem:[%s859 + $0x24] sm:$0x1]
      %v915 = vld [vmem:[%s859 + $0x28] sm:$0xf]
      %v916 = vld [vmem:[%s859 + $0x2c] sm:$0x1]
      %v917 = vld [vmem:[%s859 + $0x30] sm:$0xf]
      %v918 = vld [vmem:[%s859 + $0x34] sm:$0x1]
      %v919 = vld [vmem:[%s859 + $0x38] sm:$0xf]
      %v920 = vld [vmem:[%s859 + $0x3c] sm:$0x1]
      %v922 = vshrl.u32 %v905, 16
      %v924 = vrot.slane %v922, 4
      %v925 = vshll.u32 %v905, 16
      %v927 = vrot.slane %v925, 5
      %v928 = vor.u32 %v924, %v927
      %v929 = vrot.slane %v928, 4
      %v931 = vshll.u32 %v906, 16
      %v933 = vrot.slane %v931, 5
      %v934 = vsel %vm325, %v929, %v933
      %v936 = vshrl.u32 %v907, 16
      %v938 = vrot.slane %v936, 4
      %v939 = vshll.u32 %v907, 16
      %v941 = vrot.slane %v939, 5
      %v942 = vor.u32 %v938, %v941
      %v943 = vrot.slane %v942, 4
      %v945 = vshll.u32 %v908, 16
      %v947 = vrot.slane %v945, 5
      %v948 = vsel %vm325, %v943, %v947
      %v950 = vshrl.u32 %v909, 16
      %v952 = vrot.slane %v950, 4
      %v953 = vshll.u32 %v909, 16
      %v955 = vrot.slane %v953, 5
      %v956 = vor.u32 %v952, %v955
      %v957 = vrot.slane %v956, 4
      %v959 = vshll.u32 %v910, 16
      %v961 = vrot.slane %v959, 5
      %v962 = vsel %vm325, %v957, %v961
      %v964 = vshrl.u32 %v911, 16
      %v966 = vrot.slane %v964, 4
      %v967 = vshll.u32 %v911, 16
      %v969 = vrot.slane %v967, 5
      %v970 = vor.u32 %v966, %v969
      %v971 = vrot.slane %v970, 4
      %v973 = vshll.u32 %v912, 16
      %v975 = vrot.slane %v973, 5
      %v976 = vsel %vm325, %v971, %v975
      %v978 = vshrl.u32 %v913, 16
      %v980 = vrot.slane %v978, 4
      %v981 = vshll.u32 %v913, 16
      %v983 = vrot.slane %v981, 5
      %v984 = vor.u32 %v980, %v983
      %v985 = vrot.slane %v984, 4
      %v987 = vshll.u32 %v914, 16
      %v989 = vrot.slane %v987, 5
      %v990 = vsel %vm325, %v985, %v989
      %v992 = vshrl.u32 %v915, 16
      %v994 = vrot.slane %v992, 4
      %v995 = vshll.u32 %v915, 16
      %v997 = vrot.slane %v995, 5
      %v998 = vor.u32 %v994, %v997
      %v999 = vrot.slane %v998, 4
      %v1001 = vshll.u32 %v916, 16
      %v1003 = vrot.slane %v1001, 5
      %v1004 = vsel %vm325, %v999, %v1003
      %v1006 = vshrl.u32 %v917, 16
      %v1008 = vrot.slane %v1006, 4
      %v1009 = vshll.u32 %v917, 16
      %v1011 = vrot.slane %v1009, 5
      %v1012 = vor.u32 %v1008, %v1011
      %v1013 = vrot.slane %v1012, 4
      %v1015 = vshll.u32 %v918, 16
      %v1017 = vrot.slane %v1015, 5
      %v1018 = vsel %vm325, %v1013, %v1017
      %v1020 = vshrl.u32 %v919, 16
      %v1022 = vrot.slane %v1020, 4
      %v1023 = vshll.u32 %v919, 16
      %v1025 = vrot.slane %v1023, 5
      %v1026 = vor.u32 %v1022, %v1025
      %v1027 = vrot.slane %v1026, 4
      %v1029 = vshll.u32 %v920, 16
      %v1031 = vrot.slane %v1029, 5
      %v1032 = vsel %vm325, %v1027, %v1031
      %v1033 = vunpack.c.l.b16 %v934
      %v1034 = vunpack.c.l.b16 %v948
      %v1035 = vunpack.c.l.b16 %v962
      %v1036 = vunpack.c.l.b16 %v976
      %v1037 = vunpack.c.l.b16 %v990
      %v1038 = vunpack.c.l.b16 %v1004
      %v1039 = vunpack.c.l.b16 %v1018
      %v1040 = vunpack.c.l.b16 %v1032
      %v1041 = vpack.c.b16 %v1034, %v1033
      %v1042 = vpack.c.b16 %v1036, %v1035
      %v1043 = vpack.c.b16 %v1038, %v1037
      %v1044 = vpack.c.b16 %v1040, %v1039
      %1045 = vrot.lane.b32.xlu0 %v1041, 56
      %v1046 = vpop.permute.xlu0 %1045
      %1047 = vrot.lane.b32.xlu0 %v1042, 56
      %v1048 = vpop.permute.xlu0 %1047
      %1049 = vrot.lane.b32.xlu0 %v1043, 56
      %v1050 = vpop.permute.xlu0 %1049
      %1051 = vrot.lane.b32.xlu0 %v1044, 56
      %v1052 = vpop.permute.xlu0 %1051
      %vm1057 = vcmask 523712
      %1058 = vst.msk [vmem:[#allocation2] sm:$0xff] %vm1057, %v1046
      %1059 = vst.msk [vmem:[#allocation2 + $0x8] sm:$0xff] %vm1057, %v1048
      %1060 = vst.msk [vmem:[#allocation2 + $0x10] sm:$0xff] %vm1057, %v1050
      %1061 = vst.msk [vmem:[#allocation2 + $0x18] sm:$0xff] %vm1057, %v1052
      %v1062 = vld [vmem:[%s859] sm:$0xe]
      %v1063 = vld [vmem:[%s859 + $0x4] sm:$0x1]
      %v1064 = vld [vmem:[%s859 + $0x8] sm:$0xe]
      %v1065 = vld [vmem:[%s859 + $0xc] sm:$0x1]
      %v1066 = vld [vmem:[%s859 + $0x10] sm:$0xe]
      %v1067 = vld [vmem:[%s859 + $0x14] sm:$0x1]
      %v1068 = vld [vmem:[%s859 + $0x18] sm:$0xe]
      %v1069 = vld [vmem:[%s859 + $0x1c] sm:$0x1]
      %v1070 = vld [vmem:[%s859 + $0x20] sm:$0xe]
      %v1071 = vld [vmem:[%s859 + $0x24] sm:$0x1]
      %v1072 = vld [vmem:[%s859 + $0x28] sm:$0xe]
      %v1073 = vld [vmem:[%s859 + $0x2c] sm:$0x1]
      %v1074 = vld [vmem:[%s859 + $0x30] sm:$0xe]
      %v1075 = vld [vmem:[%s859 + $0x34] sm:$0x1]
      %v1076 = vld [vmem:[%s859 + $0x38] sm:$0xe]
      %v1077 = vld [vmem:[%s859 + $0x3c] sm:$0x1]
      %v1094 = vrot.slane %v1062, 5
      %v1095 = vrot.slane %v1094, 4
      %v1096 = vrot.slane %v1063, 5
      %v1097 = vsel %vm501, %v1095, %v1096
      %v1098 = vrot.slane %v1064, 5
      %v1099 = vrot.slane %v1098, 4
      %v1100 = vrot.slane %v1065, 5
      %v1101 = vsel %vm501, %v1099, %v1100
      %v1102 = vrot.slane %v1066, 5
      %v1103 = vrot.slane %v1102, 4
      %v1104 = vrot.slane %v1067, 5
      %v1105 = vsel %vm501, %v1103, %v1104
      %v1106 = vrot.slane %v1068, 5
      %v1107 = vrot.slane %v1106, 4
      %v1108 = vrot.slane %v1069, 5
      %v1109 = vsel %vm501, %v1107, %v1108
      %v1110 = vrot.slane %v1070, 5
      %v1111 = vrot.slane %v1110, 4
      %v1112 = vrot.slane %v1071, 5
      %v1113 = vsel %vm501, %v1111, %v1112
      %v1114 = vrot.slane %v1072, 5
      %v1115 = vrot.slane %v1114, 4
      %v1116 = vrot.slane %v1073, 5
      %v1117 = vsel %vm501, %v1115, %v1116
      %v1118 = vrot.slane %v1074, 5
      %v1119 = vrot.slane %v1118, 4
      %v1120 = vrot.slane %v1075, 5
      %v1121 = vsel %vm501, %v1119, %v1120
      %v1122 = vrot.slane %v1076, 5
      %v1123 = vrot.slane %v1122, 4
      %v1124 = vrot.slane %v1077, 5
      %v1125 = vsel %vm501, %v1123, %v1124
      %v1126 = vunpack.c.l.b16 %v1097
      %v1127 = vunpack.c.l.b16 %v1101
      %v1128 = vunpack.c.l.b16 %v1105
      %v1129 = vunpack.c.l.b16 %v1109
      %v1130 = vunpack.c.l.b16 %v1113
      %v1131 = vunpack.c.l.b16 %v1117
      %v1132 = vunpack.c.l.b16 %v1121
      %v1133 = vunpack.c.l.b16 %v1125
      %v1134 = vpack.c.b16 %v1127, %v1126
      %v1135 = vpack.c.b16 %v1129, %v1128
      %v1136 = vpack.c.b16 %v1131, %v1130
      %v1137 = vpack.c.b16 %v1133, %v1132
      %1138 = vrot.lane.b32.xlu0 %v1134, 64
      %v1139 = vpop.permute.xlu0 %1138
      %1140 = vrot.lane.b32.xlu0 %v1135, 64
      %v1141 = vpop.permute.xlu0 %1140
      %1142 = vrot.lane.b32.xlu0 %v1136, 64
      %v1143 = vpop.permute.xlu0 %1142
      %1144 = vrot.lane.b32.xlu0 %v1137, 64
      %v1145 = vpop.permute.xlu0 %1144
      %vm1150 = vcmask 589312
      %1151 = vst.msk [vmem:[#allocation2] sm:$0xff] %vm1150, %v1139
      %1152 = vst.msk [vmem:[#allocation2 + $0x8] sm:$0xff] %vm1150, %v1141
      %1153 = vst.msk [vmem:[#allocation2 + $0x10] sm:$0xff] %vm1150, %v1143
      %1154 = vst.msk [vmem:[#allocation2 + $0x18] sm:$0xff] %vm1150, %v1145
      %v1155 = vld [vmem:[#allocation2] sm:$0xff]
      %v1156 = vld [vmem:[#allocation2 + $0x8] sm:$0xff]
      %v1157 = vld [vmem:[#allocation2 + $0x10] sm:$0xff]
      %v1158 = vld [vmem:[#allocation2 + $0x18] sm:$0xff]
      %v1159 = vunpack.c.l.bf16 %v1155
      %v1160 = vunpack.c.h.bf16 %v1155
      %v1161 = vunpack.c.l.bf16 %v1156
      %v1162 = vunpack.c.h.bf16 %v1156
      %v1163 = vunpack.c.l.bf16 %v1157
      %v1164 = vunpack.c.h.bf16 %v1157
      %v1165 = vunpack.c.l.bf16 %v1158
      %v1166 = vunpack.c.h.bf16 %v1158
      %v1167 = vld [vmem:[%s2] sm:$0x1]
      %v1169 = vlaneseq
      %v1170 = vshrl.u32 %v1169, 7
      %v1171 = vsub.s32 0, %v1170
      %v1172 = vrot.slane %v1167, %v1171
      %v1174 = vmul.f32 %v1159, %v1172
      %v1175 = vmul.f32 %v1160, %v1172
      %v1176 = vmul.f32 %v1161, %v1172
      %v1177 = vmul.f32 %v1162, %v1172
      %v1178 = vmul.f32 %v1163, %v1172
      %v1179 = vmul.f32 %v1164, %v1172
      %v1180 = vmul.f32 %v1165, %v1172
      %v1181 = vmul.f32 %v1166, %v1172
      %v1182 = vld [vmem:[%s3] sm:$0x1]
      %v1184 = vlaneseq
      %v1185 = vshrl.u32 %v1184, 7
      %v1186 = vsub.s32 0, %v1185
      %v1187 = vrot.slane %v1182, %v1186
      %v1189 = vadd.f32 %v1174, %v1187
      %v1190 = vadd.f32 %v1175, %v1187
      %v1191 = vadd.f32 %v1176, %v1187
      %v1192 = vadd.f32 %v1177, %v1187
      %v1193 = vadd.f32 %v1178, %v1187
      %v1194 = vadd.f32 %v1179, %v1187
      %v1195 = vadd.f32 %v1180, %v1187
      %v1196 = vadd.f32 %v1181, %v1187
      %v1197 = vmax.f32 %v1189, 0.0
      %v1198 = vmax.f32 %v1190, 0.0
      %v1199 = vmax.f32 %v1191, 0.0
      %v1200 = vmax.f32 %v1192, 0.0
      %v1201 = vmax.f32 %v1193, 0.0
      %v1202 = vmax.f32 %v1194, 0.0
      %v1203 = vmax.f32 %v1195, 0.0
      %v1204 = vmax.f32 %v1196, 0.0
      %v1205 = vpack.c.bf16 %v1198, %v1197
      %v1206 = vpack.c.bf16 %v1200, %v1199
      %v1207 = vpack.c.bf16 %v1202, %v1201
      %v1208 = vpack.c.bf16 %v1204, %v1203
      %v1209 = vld [vmem:[%s1] sm:$0xf]
      %v1210 = vld [vmem:[%s1 + $0x4] sm:$0xf]
      %v1211 = vld [vmem:[%s1 + $0x8] sm:$0xf]
      %v1212 = vld [vmem:[%s1 + $0xc] sm:$0xf]
      %v1213 = vld [vmem:[%s1 + $0x10] sm:$0xf]
      %v1214 = vld [vmem:[%s1 + $0x14] sm:$0xf]
      %v1215 = vld [vmem:[%s1 + $0x18] sm:$0xf]
      %v1216 = vld [vmem:[%s1 + $0x1c] sm:$0xf]
      %v1217 = vld [vmem:[%s1 + $0x20] sm:$0xf]
      %v1227 = vunpack.c.l.b16 %v1209
      %v1228 = vunpack.c.l.b16 %v1210
      %v1229 = vunpack.c.l.b16 %v1211
      %v1230 = vunpack.c.l.b16 %v1212
      %v1231 = vunpack.c.l.b16 %v1213
      %v1232 = vunpack.c.l.b16 %v1214
      %v1233 = vunpack.c.l.b16 %v1215
      %v1234 = vunpack.c.l.b16 %v1216
      %v1235 = vunpack.c.l.b16 %v1217
      %v1236 = vpack.c.b16 %v1228, %v1227
      %v1237 = vpack.c.b16 %v1230, %v1229
      %v1238 = vpack.c.b16 %v1232, %v1231
      %v1239 = vpack.c.b16 %v1234, %v1233
      %v1240 = vpack.c.b16 %v1235, %v1235
      %vm1245 = vcmask 588800
      %v1247 = vsel %vm1245, %v1205, 0
      %v1250 = vsel %vm1245, %v1206, 0
      %v1253 = vsel %vm1245, %v1207, 0
      %v1256 = vsel %vm1245, %v1208, 0
      %vm1258 = vcmask 1043456
      %v1260 = vsel %vm1258, %v1240, 0
      %1262 = vmatprep.subr.bf16.mxu0 0
      %1263 = vmatpush1.bf16.msra.mxu0 %v1236
      %1264 = vmatprep.subr.bf16.mxu0 0
      %1265 = vmatpush1.bf16.msra.mxu0 %v1237
      %1266 = vmatprep.subr.bf16.mxu0 0
      %1267 = vmatpush1.bf16.msra.mxu0 %v1238
      %1268 = vmatprep.subr.bf16.mxu0 0
      %1269 = vmatpush1.bf16.msra.mxu0 %v1239
      %1270 = vmatprep.subr.bf16.mxu0 0
      %1271 = vmatpush1.bf16.msra.mxu0 %v1260
      %1272 = vmatprep.subr.bf16.mxu0 0
      %1273 = vmatpush1.bf16.msra.mxu0 0
      %1274 = vmatprep.subr.bf16.mxu0 0
      %1275 = vmatpush1.bf16.msra.mxu0 0
      %1276 = vmatprep.subr.bf16.mxu0 0
      %1277 = vmatpush1.bf16.msra.mxu0 0
      %1278 = vmatprep.subr.bf16.mxu0 0
      %1279 = vmatpush1.bf16.msra.mxu0 0
      %1280 = vmatprep.subr.bf16.mxu0 0
      %1281 = vmatpush1.bf16.msra.mxu0 0
      %1282 = vmatprep.subr.bf16.mxu0 0
      %1283 = vmatpush1.bf16.msra.mxu0 0
      %1284 = vmatprep.subr.bf16.mxu0 0
      %1285 = vmatpush1.bf16.msra.mxu0 0
      %1286 = vmatprep.subr.bf16.mxu0 0
      %1287 = vmatpush1.bf16.msra.mxu0 0
      %1288 = vmatprep.subr.bf16.mxu0 0
      %1289 = vmatpush1.bf16.msra.mxu0 0
      %1290 = vmatprep.subr.bf16.mxu0 0
      %1291 = vmatpush1.bf16.msra.mxu0 0
      %1292 = vmatprep.subr.bf16.mxu0 0
      %1293 = vmatpush1.bf16.msra.mxu0 0
      %1294 = vmatprep.mubr.bf16.mxu0 0
      %1295 = vmatmul.mubr.bf16.gmra.mrb[0].mxu0 %v1247
      %v1296 = vpop.f32.mrb[0].mxu0
      %v1297 = vadd.f32 0.0, %v1296
      %v1298 = vpop.f32.mrb[0].mxu0
      %v1299 = vpop.f32.mrb[0].mxu0
      %v1300 = vadd.f32 0.0, %v1299
      %v1301 = vpop.f32.mrb[0].mxu0
      %1302 = vmatprep.mubr.bf16.mxu0 0
      %1303 = vmatmul.mubr.bf16.gmra.mrb[0].mxu0 %v1250
      %v1304 = vpop.f32.mrb[0].mxu0
      %v1305 = vadd.f32 0.0, %v1304
      %v1306 = vpop.f32.mrb[0].mxu0
      %v1307 = vpop.f32.mrb[0].mxu0
      %v1308 = vadd.f32 0.0, %v1307
      %v1309 = vpop.f32.mrb[0].mxu0
      %1310 = vmatprep.mubr.bf16.mxu0 0
      %1311 = vmatmul.mubr.bf16.gmra.mrb[0].mxu0 %v1253
      %v1312 = vpop.f32.mrb[0].mxu0
      %v1313 = vadd.f32 0.0, %v1312
      %v1314 = vpop.f32.mrb[0].mxu0
      %v1315 = vpop.f32.mrb[0].mxu0
      %v1316 = vadd.f32 0.0, %v1315
      %v1317 = vpop.f32.mrb[0].mxu0
      %1318 = vmatprep.mubr.bf16.mxu0 0
      %1319 = vmatmul.mubr.bf16.gmra.mrb[0].mxu0 %v1256
      %v1320 = vpop.f32.mrb[0].mxu0
      %v1321 = vadd.f32 0.0, %v1320
      %v1322 = vpop.f32.mrb[0].mxu0
      %v1323 = vpop.f32.mrb[0].mxu0
      %v1324 = vadd.f32 0.0, %v1323
      %v1325 = vpop.f32.mrb[0].mxu0
      %1326 = vdwg.mxu0
      %v1327 = vpack.c.bf16 %v1300, %v1297
      %v1328 = vpack.c.bf16 %v1308, %v1305
      %v1329 = vpack.c.bf16 %v1316, %v1313
      %v1330 = vpack.c.bf16 %v1324, %v1321
      %v1335 = vunpack.c.l.b16 %v1327
      %v1336 = vunpack.c.h.b16 %v1327
      %v1337 = vunpack.c.l.b16 %v1328
      %v1338 = vunpack.c.h.b16 %v1328
      %v1339 = vunpack.c.l.b16 %v1329
      %v1340 = vunpack.c.h.b16 %v1329
      %v1341 = vunpack.c.l.b16 %v1330
      %v1342 = vunpack.c.h.b16 %v1330
      %v1343 = vpack.c.b16 %v1335, %v1335
      %v1344 = vpack.c.b16 %v1336, %v1336
      %v1345 = vpack.c.b16 %v1337, %v1337
      %v1346 = vpack.c.b16 %v1338, %v1338
      %v1347 = vpack.c.b16 %v1339, %v1339
      %v1348 = vpack.c.b16 %v1340, %v1340
      %v1349 = vpack.c.b16 %v1341, %v1341
      %v1350 = vpack.c.b16 %v1342, %v1342
      %vm1359 = vcmask 60416
      %1360 = vst.msk [vmem:[%s262] sm:$0xf] %vm1359, %v1343
      %1361 = vst.msk [vmem:[%s262 + $0x4] sm:$0xf] %vm1359, %v1344
      %1362 = vst.msk [vmem:[%s262 + $0x8] sm:$0xf] %vm1359, %v1345
      %1363 = vst.msk [vmem:[%s262 + $0xc] sm:$0xf] %vm1359, %v1346
      %1364 = vst.msk [vmem:[%s262 + $0x10] sm:$0xf] %vm1359, %v1347
      %1365 = vst.msk [vmem:[%s262 + $0x14] sm:$0xf] %vm1359, %v1348
      %1366 = vst.msk [vmem:[%s262 + $0x18] sm:$0xf] %vm1359, %v1349
      %1367 = vst.msk [vmem:[%s262 + $0x1c] sm:$0xf] %vm1359, %v1350
      %v1368 = vsel %vm302, %v1297, 0.0
      %v1369 = vsel %vm302, %v1300, 0.0
      %v1370 = vadd.f32 %v1368, %v1369
      %v1371 = vsel %vm302, %v1305, 0.0
      %v1372 = vadd.f32 %v1370, %v1371
      %v1373 = vsel %vm302, %v1308, 0.0
      %v1374 = vadd.f32 %v1372, %v1373
      %v1375 = vsel %vm302, %v1313, 0.0
      %v1376 = vadd.f32 %v1374, %v1375
      %v1377 = vsel %vm302, %v1316, 0.0
      %v1378 = vadd.f32 %v1376, %v1377
      %v1379 = vsel %vm302, %v1321, 0.0
      %v1380 = vadd.f32 %v1378, %v1379
      %v1381 = vsel %vm302, %v1324, 0.0
      %v1382 = vadd.f32 %v1380, %v1381
      %v1383 = vrot.slane %v1382, 4
      %v1384 = vadd.f32 %v1382, %v1383
      %v1385 = vrot.slane %v1384, 2
      %v1386 = vadd.f32 %v1384, %v1385
      %v1387 = vrot.slane %v1386, 1
      %v1388 = vadd.f32 %v1386, %v1387
      %vm1389 = vcmask 57344
      %1390 = vst.msk [vmem:[%s265] sm:$0x1] %vm1389, %v1388
      %v1391 = vmul.f32 %v1297, %v1297
      %v1392 = vmul.f32 %v1300, %v1300
      %v1393 = vmul.f32 %v1305, %v1305
      %v1394 = vmul.f32 %v1308, %v1308
      %v1395 = vmul.f32 %v1313, %v1313
      %v1396 = vmul.f32 %v1316, %v1316
      %v1397 = vmul.f32 %v1321, %v1321
      %v1398 = vmul.f32 %v1324, %v1324
      %v1399 = vsel %vm302, %v1391, 0.0
      %v1400 = vsel %vm302, %v1392, 0.0
      %v1401 = vadd.f32 %v1399, %v1400
      %v1402 = vsel %vm302, %v1393, 0.0
      %v1403 = vadd.f32 %v1401, %v1402
      %v1404 = vsel %vm302, %v1394, 0.0
      %v1405 = vadd.f32 %v1403, %v1404
      %v1406 = vsel %vm302, %v1395, 0.0
      %v1407 = vadd.f32 %v1405, %v1406
      %v1408 = vsel %vm302, %v1396, 0.0
      %v1409 = vadd.f32 %v1407, %v1408
      %v1410 = vsel %vm302, %v1397, 0.0
      %v1411 = vadd.f32 %v1409, %v1410
      %v1412 = vsel %vm302, %v1398, 0.0
      %v1413 = vadd.f32 %v1411, %v1412
      %v1414 = vrot.slane %v1413, 4
      %v1415 = vadd.f32 %v1413, %v1414
      %v1416 = vrot.slane %v1415, 2
      %v1417 = vadd.f32 %v1415, %v1416
      %v1418 = vrot.slane %v1417, 1
      %v1419 = vadd.f32 %v1417, %v1418
      %1420 = vst.msk [vmem:[%s268] sm:$0x1] %vm1389, %v1419
      %p1421 = scmp.lt.s32.totalorder %s18, 1
      %s1422 = scalar_select %p1421, %s18, 1
      %s1423 = smul.addr %s1422, 8
      %s1424 = smul.addr %s1423, 4
      %s1425 = scalar_lea.vmem %s4, %s1424
      %p1426 = scmp.lt.s32.totalorder %s18, 1
      %s1427 = scalar_select %p1426, %s18, 1
      %s1428 = scalar_lea.vmem %s5, %s1427
      %p1429 = scmp.lt.s32.totalorder %s18, 1
      %s1430 = scalar_select %p1429, %s18, 1
      %s1431 = scalar_lea.vmem %s6, %s1430
      // Predicated region
      $region37: #{a_call__.5} parent=35 // pred_check
        %p1432 = pneg %p125
      $region38: #{a_call__.5} parent=35 // pred_check_branch
        %1434 = sbr.rel (%p1432) target = $region40
      $region39: #{a_call__.5} parent=35 // pred_region
        _
      $region40: #{a_call__.5} parent=35 // pred_fallthru
        _
      // Predicated region
      $region41: #{a_call__.5} parent=35 // pred_check
        %p1435 = pneg %p151
      $region42: #{a_call__.5} parent=35 // pred_check_branch
        %1437 = sbr.rel (%p1435) target = $region44
      $region43: #{a_call__.5} parent=35 // pred_region
        _
      $region44: #{a_call__.5} parent=35 // pred_fallthru
        _
      // Predicated region
      $region45: #{a_call__.5} parent=35 // pred_check
        %p1438 = pneg %p177
      $region46: #{a_call__.5} parent=35 // pred_check_branch
        %1440 = sbr.rel (%p1438) target = $region48
      $region47: #{a_call__.5} parent=35 // pred_region
        _
      $region48: #{a_call__.5} parent=35 // pred_fallthru
        _
    $region36: #{a_call__.5} parent=5 // pred_fallthru
      _
    %p1441 = scmp.le.s32.totalorder 2, %s13
    // Predicated region
    $region49: #{a_call__.5} parent=5 // pred_check
      %p1442 = pneg %p1441
    $region50: #{a_call__.5} parent=5 // pred_check_branch
      %1444 = sbr.rel (%p1442) target = $region52
    $region51: #{a_call__.5} parent=5 // pred_region
      %s1445 = ssub.s32 %s13, 2
      // Predicated region
      $region53: #{a_call__.5} parent=51 // pred_check
        %p1446 = pneg %p131
      $region54: #{a_call__.5} parent=51 // pred_check_branch
        %1448 = sbr.rel (%p1446) target = $region56
      $region55: #{a_call__.5} parent=51 // pred_region
        %p1449 = scmp.lt.s32.totalorder %s19, 1
        %s1450 = scalar_select %p1449, %s19, 1
        %s1451 = smul.addr %s1450, 8
        %s1452 = smul.addr %s1451, 4
        %s1453 = scalar_lea.vmem %s4, %s1452
      $region56: #{a_call__.5} parent=51 // pred_fallthru
        _
      // Predicated region
      $region57: #{a_call__.5} parent=51 // pred_check
        %p1454 = pneg %p157
      $region58: #{a_call__.5} parent=51 // pred_check_branch
        %1456 = sbr.rel (%p1454) target = $region60
      $region59: #{a_call__.5} parent=51 // pred_region
        %p1457 = scmp.lt.s32.totalorder %s19, 1
        %s1458 = scalar_select %p1457, %s19, 1
        %s1459 = scalar_lea.vmem %s5, %s1458
      $region60: #{a_call__.5} parent=51 // pred_fallthru
        _
      // Predicated region
      $region61: #{a_call__.5} parent=51 // pred_check
        %p1460 = pneg %p183
      $region62: #{a_call__.5} parent=51 // pred_check_branch
        %1462 = sbr.rel (%p1460) target = $region64
      $region63: #{a_call__.5} parent=51 // pred_region
        %p1463 = scmp.lt.s32.totalorder %s19, 1
        %s1464 = scalar_select %p1463, %s19, 1
        %s1465 = scalar_lea.vmem %s6, %s1464
      $region64: #{a_call__.5} parent=51 // pred_fallthru
        _
    $region52: #{a_call__.5} parent=5 // pred_fallthru
      _
  $region6: #{a_call__.5} parent=0 // loop_footer
    %s17 = sadd.s32 1, %s13
  $region7: #{a_call__.5} parent=0 // loop_footer_branch
    %12 = sbr.rel target = $region3
  $region8: #{a_call__.5} parent=0 // loop_exit
    _

</llo_original>
